<compile_context>
chip_gen: v7x
topology: tpu7x:2x2x1
jax: 0.10.0
libtpu: 0.0.40
codegen_flags: <defaults>
</compile_context>

<pallas_src>
import functools

import jax
import jax.numpy as jnp
from jax.experimental import pallas as pl
from jax.experimental.pallas import tpu as pltpu


# ----------------------------------------------------------------------------
# Kernel 1: dense per-node GAT layer compute (attention + aggregation + linear)
# ----------------------------------------------------------------------------
def _gat_layer_kernel(node_ref, in_nbr_ref, in_edge_ref, in_mask_ref,
                      out_nbr_ref, out_edge_ref, out_mask_ref,
                      wn_ref, bn_ref, attw_ref, wng_ref, bng_ref,
                      o_ref, *, K, D):
    node = node_ref[...]                                    # (tm, D)
    in_m = in_mask_ref[...].astype(jnp.float32)             # (tm, K)
    out_m = out_mask_ref[...].astype(jnp.float32)           # (tm, K)

    wn = wn_ref[...]        # (2D, D)  nodeW      (stored (in, out))
    bn = bn_ref[...]        # (1, D)
    attw = attw_ref[...]    # (D, D)   attenW
    wng = wng_ref[...]      # (2D, D)  neighbors
    bng = bng_ref[...]      # (1, D)

    # ---- out path: per-neighbor attention logits (static unroll over K) ----
    out_cats = []
    logits = []
    for k in range(K):
        cat_k = jnp.concatenate(
            [out_nbr_ref[:, k * D:(k + 1) * D],
             out_edge_ref[:, k * D:(k + 1) * D]], axis=-1)   # (tm, 2D)
        out_cats.append(cat_k)
        # native-dtype operands, f32 accumulation on the MXU
        nbr_k = jnp.dot(cat_k, wn, preferred_element_type=jnp.float32) + bn
        att_k = jnp.dot(nbr_k, attw, preferred_element_type=jnp.float32)
        logits.append(jnp.sum(att_k * node, axis=-1, keepdims=True))  # (tm, 1)

    logit = jnp.concatenate(logits, axis=-1)                 # (tm, K)
    # Softmax over all K neighbors (mask is NOT applied inside the softmax --
    # exactly as in the PyTorch attention_on_neighbors).
    logit = logit - jnp.max(logit, axis=-1, keepdims=True)
    p = jnp.exp(logit)
    alpha = p / jnp.sum(p, axis=-1, keepdims=True)           # (tm, K)

    w = alpha * out_m                                        # (tm, K)
    out_reps = w[:, 0:1] * out_cats[0]
    for k in range(1, K):
        out_reps = out_reps + w[:, k:k + 1] * out_cats[k]    # (tm, 2D)

    # ---- in path: masked sum over neighbors ----
    in_reps = None
    for k in range(K):
        cat_k = jnp.concatenate(
            [in_nbr_ref[:, k * D:(k + 1) * D],
             in_edge_ref[:, k * D:(k + 1) * D]], axis=-1)    # (tm, 2D)
        term = in_m[:, k:k + 1] * cat_k
        in_reps = term if in_reps is None else in_reps + term

    # ---- shared Linear(2D -> D) + residual ----
    out_nodes = jnp.dot(out_reps, wng, preferred_element_type=jnp.float32) + bng
    in_nodes = jnp.dot(in_reps, wng, preferred_element_type=jnp.float32) + bng
    o_ref[...] = (node + out_nodes + in_nodes).astype(o_ref.dtype)


# ----------------------------------------------------------------------------
# Kernel 2: MLP readout (Linear -> ReLU -> Linear -> sum over nodes -> softmax)
# ----------------------------------------------------------------------------
def _readout_kernel(h_ref, w1_ref, b1_ref, w2_ref, b2_ref, o_ref, acc_ref):
    @pl.when(pl.program_id(0) == 0)
    def _init():
        acc_ref[...] = jnp.zeros_like(acc_ref)

    h = jnp.dot(h_ref[...], w1_ref[...],
                preferred_element_type=jnp.float32) + b1_ref[...]
    h = jnp.maximum(h, 0.0)                                   # ReLU
    y = jnp.dot(h, w2_ref[...],
                preferred_element_type=jnp.float32) + b2_ref[...]
    acc_ref[...] += jnp.sum(y, axis=0, keepdims=True)          # (1, 2)

    @pl.when(pl.program_id(0) == pl.num_programs(0) - 1)
    def _finalize():
        z = acc_ref[...]
        z = z - jnp.max(z, axis=-1, keepdims=True)
        e = jnp.exp(z)
        o_ref[...] = (e / jnp.sum(e, axis=-1, keepdims=True)).astype(o_ref.dtype)


def _pick_row_tile(n, max_tm=256):
    """Largest multiple-of-8 divisor of n <= max_tm (falls back to the full dim)."""
    best = None
    t = 8
    while t <= min(n, max_tm):
        if n % t == 0:
            best = t
        t += 8
    return best if best is not None else n


# ----------------------------------------------------------------------------
# Forward wrapper (mirrors GATConv.forward)
# ----------------------------------------------------------------------------
def gat_conv_forward(params, batch_data, *, tm=None):
    (node_reps, mask, in_indices, in_edges, in_mask,
     out_indices, out_edges, out_mask, edge_index, edge_index_negative) = batch_data

    # TODO(synk): nn.Dropout(gnn_dropout) is stochastic only in training; this
    # implements the eval-mode identity.
    emb = params["edge_embedding"]                    # (V, D)
    wn, bn = params["nodeW_w"], params["nodeW_b"]     # (2D, D), (D,)
    attw = params["attenW"]                           # (D, D)
    wng, bng = params["neighbors_w"], params["neighbors_b"]
    w1, b1 = params["readout_w1"], params["readout_b1"]
    w2, b2 = params["readout_w2"], params["readout_b2"]

    _, N, D = node_reps.shape
    K = in_indices.shape[2]
    H = w1.shape[1]
    dt = node_reps.dtype

    if tm is None:
        tm = _pick_row_tile(N)
    assert N % tm == 0, (N, tm)
    grid = (N // tm,)

    # Data-dependent gathers stay in XLA glue (not expressible as rectangular
    # BlockSpec tiles without per-row DMA machinery).
    node0 = node_reps[0]                                              # (N, D)
    in_nbr = jnp.take(node0, in_indices[0], axis=0).reshape(N, K * D)
    in_edg = jnp.take(emb, in_edges[0], axis=0).reshape(N, K * D)
    out_nbr = jnp.take(node0, out_indices[0], axis=0).reshape(N, K * D)
    out_edg = jnp.take(emb, out_edges[0], axis=0).reshape(N, K * D)
    in_m = in_mask[0].astype(dt)                                      # (N, K)
    out_m = out_mask[0].astype(dt)

    row = lambda i: (i, 0)
    const = lambda i: (0, 0)

    hidden2d = pl.pallas_call(
        functools.partial(_gat_layer_kernel, K=K, D=D),
        out_shape=jax.ShapeDtypeStruct((N, D), dt),
        grid=grid,
        in_specs=[
            # node_reps (1, N, D): batch-0 selected via BlockSpec (no host slice)
            pl.BlockSpec((None, tm, D), lambda i: (0, i, 0)),
            pl.BlockSpec((tm, K * D), row),   # in-neighbor node reps
            pl.BlockSpec((tm, K * D), row),   # in-edge embeddings
            pl.BlockSpec((tm, K), row),       # in mask
            pl.BlockSpec((tm, K * D), row),   # out-neighbor node reps
            pl.BlockSpec((tm, K * D), row),   # out-edge embeddings
            pl.BlockSpec((tm, K), row),       # out mask
            pl.BlockSpec((2 * D, D), const),  # nodeW      (resident)
            pl.BlockSpec((1, D), const),      # nodeW bias
            pl.BlockSpec((D, D), const),      # attenW     (resident)
            pl.BlockSpec((2 * D, D), const),  # neighbors  (resident)
            pl.BlockSpec((1, D), const),      # neighbors bias
        ],
        out_specs=pl.BlockSpec((tm, D), row),
        compiler_params=pltpu.CompilerParams(
            dimension_semantics=("parallel",)),  # shard row tiles across v7x TCs
    )(node_reps, in_nbr, in_edg, in_m, out_nbr, out_edg, out_m,
      wn, bn.reshape(1, D), attw, wng, bng.reshape(1, D))

    readout = pl.pallas_call(
        _readout_kernel,
        out_shape=jax.ShapeDtypeStruct((1, 2), dt),
        grid=grid,
        in_specs=[
            pl.BlockSpec((tm, D), row),
            pl.BlockSpec((D, H), const),
            pl.BlockSpec((1, H), const),
            pl.BlockSpec((H, 2), const),
            pl.BlockSpec((1, 2), const),
        ],
        out_specs=pl.BlockSpec((1, 2), const),
        scratch_shapes=[pltpu.VMEM((1, 2), jnp.float32)],
        compiler_params=pltpu.CompilerParams(
            dimension_semantics=("arbitrary",)),  # sequential reduction over tiles
    )(hidden2d, w1, b1.reshape(1, H), w2, b2.reshape(1, 2)).reshape(2)

    node_hidden = hidden2d[None]                     # (1, N, D) like PyTorch
    new_batch_data = [node_hidden, mask, in_indices, in_edges, in_mask,
                      out_indices, out_edges, out_mask, edge_index,
                      edge_index_negative]
    return node_hidden, new_batch_data, readout


# ----------------------------------------------------------------------------
# Pure-JAX reference (direct translation of the PyTorch forward, eval mode)
# ----------------------------------------------------------------------------
def _reference_forward(params, batch_data):
    (node_reps, _, in_idx, in_edges, in_mask,
     out_idx, out_edges, out_mask, _, _) = batch_data
    E = params["edge_embedding"]
    x0 = node_reps[0]
    in_nbr = x0[in_idx[0]]
    in_edge = E[in_edges[0]]
    in_reps = (jnp.concatenate([in_nbr, in_edge], -1)
               * in_mask[0][..., None]).sum(1)
    out_nbr = x0[out_idx[0]]
    out_edge = E[out_edges[0]]
    out_full = jnp.concatenate([out_nbr, out_edge], -1)          # (N, K, 2D)
    nbr = out_full @ params["nodeW_w"] + params["nodeW_b"]
    att = nbr @ params["attenW"]
    logits = jnp.einsum("nkd,nd->nk", att, x0)
    alpha = jax.nn.softmax(logits, axis=1)[..., None]
    out_reps = (out_full * alpha * out_mask[0][..., None]).sum(1)
    out_nodes = out_reps @ params["neighbors_w"] + params["neighbors_b"]
    in_nodes = in_reps @ params["neighbors_w"] + params["neighbors_b"]
    node_hidden = node_reps + out_nodes + in_nodes
    t = jnp.maximum(node_hidden[0] @ params["readout_w1"] + params["readout_b1"], 0.0)
    t = t @ params["readout_w2"] + params["readout_b2"]
    readout = jax.nn.softmax(t.sum(0))
    return node_hidden, readout


def _uniform_linear(key, fan_in, fan_out, dtype=jnp.float32):
    """nn.Linear-style init, weight stored transposed as (in, out)."""
    kw, kb = jax.random.split(key)
    bound = 1.0 / float(fan_in) ** 0.5
    w = jax.random.uniform(kw, (fan_in, fan_out), dtype, -bound, bound)
    b = jax.random.uniform(kb, (fan_out,), dtype, -bound, bound)
    return w, b


if __name__ == "__main__":
    D = 128          # embed_dim (lane-dense: multiple of 128)
    H = D // 4       # MLPreadout hidden = 32
    N = 16           # node_num
    K = 4            # neighbor_num
    V = 16           # edge_vocab_size

    key = jax.random.PRNGKey(0)
    keys = jax.random.split(key, 13)

    node_reps = jax.random.normal(keys[0], (1, N, D), jnp.float32)
    mask = jnp.ones((1, N), jnp.float32)
    in_indices = jax.random.randint(keys[1], (1, N, K), 0, N, jnp.int32)
    in_edges = jax.random.randint(keys[2], (1, N, K), 0, V, jnp.int32)
    in_mask = (jax.random.uniform(keys[3], (1, N, K)) < 0.75).astype(jnp.float32)
    out_indices = jax.random.randint(keys[4], (1, N, K), 0, N, jnp.int32)
    out_edges = jax.random.randint(keys[5], (1, N, K), 0, V, jnp.int32)
    out_mask = (jax.random.uniform(keys[6], (1, N, K)) < 0.75).astype(jnp.float32)
    edge_index = jnp.zeros((2, 8), jnp.int32)             # unused in forward
    edge_index_negative = jnp.zeros((2, 8), jnp.int32)    # unused in forward

    nodeW_w, nodeW_b = _uniform_linear(keys[7], 2 * D, D)
    neighbors_w, neighbors_b = _uniform_linear(keys[8], 2 * D, D)
    readout_w1, readout_b1 = _uniform_linear(keys[9], D, H)
    readout_w2, readout_b2 = _uniform_linear(keys[10], H, 2)
    # attenW is nn.Parameter(torch.randn(D, D)); scaled here so the demo's
    # attention logits stay in a well-conditioned softmax range.
    attenW = 0.02 * jax.random.normal(keys[11], (D, D), jnp.float32)
    edge_embedding = 0.1 * jax.random.normal(keys[12], (V, D), jnp.float32)

    params = dict(edge_embedding=edge_embedding,
                  nodeW_w=nodeW_w, nodeW_b=nodeW_b, attenW=attenW,
                  neighbors_w=neighbors_w, neighbors_b=neighbors_b,
                  readout_w1=readout_w1, readout_b1=readout_b1,
                  readout_w2=readout_w2, readout_b2=readout_b2)

    batch_data = [node_reps, mask, in_indices, in_edges, in_mask,
                  out_indices, out_edges, out_mask, edge_index,
                  edge_index_negative]

    # tm=8 -> grid=(2,): exercises the parallel row-tile grid and the
    # accumulating readout grid.
    node_hidden, new_batch, readout = gat_conv_forward(params, batch_data, tm=8)
    node_hidden = jax.block_until_ready(node_hidden)
    readout = jax.block_until_ready(readout)

    ref_hidden, ref_readout = _reference_forward(params, batch_data)

    assert node_hidden.shape == (1, N, D)
    assert readout.shape == (2,)
    assert jnp.allclose(node_hidden, ref_hidden, atol=2e-4, rtol=2e-4), (
        float(jnp.max(jnp.abs(node_hidden - ref_hidden))))
    assert jnp.allclose(readout, ref_readout, atol=2e-4, rtol=2e-4), (
        readout, ref_readout)
    assert jnp.allclose(jnp.sum(readout), 1.0, atol=1e-5)

    print("KERNEL_OK")
</pallas_src>

<mosaic_0001>
module attributes {stable_mosaic.version = 11 : i64} {
  func.func @_gat_layer_kernel(%arg0: i32, %arg1: memref<1x8x128xf32, #tpu.memory_space<vmem>>, %arg2: memref<8x512xf32, #tpu.memory_space<vmem>>, %arg3: memref<8x512xf32, #tpu.memory_space<vmem>>, %arg4: memref<8x4xf32, #tpu.memory_space<vmem>>, %arg5: memref<8x512xf32, #tpu.memory_space<vmem>>, %arg6: memref<8x512xf32, #tpu.memory_space<vmem>>, %arg7: memref<8x4xf32, #tpu.memory_space<vmem>>, %arg8: memref<256x128xf32, #tpu.memory_space<vmem>>, %arg9: memref<1x128xf32, #tpu.memory_space<vmem>>, %arg10: memref<128x128xf32, #tpu.memory_space<vmem>>, %arg11: memref<256x128xf32, #tpu.memory_space<vmem>>, %arg12: memref<1x128xf32, #tpu.memory_space<vmem>>, %arg13: memref<8x128xf32, #tpu.memory_space<vmem>>) attributes {dimension_semantics = [#tpu.dimension_semantics<parallel>], iteration_bounds = array<i64: 2>, scalar_prefetch = 0 : i64, scratch_operands = 0 : i64, tpu.core_type = #tpu.core_type<tc>, window_params = [{transform_indices = @transform_0, window_bounds = array<i64: 1, 8, 128>}, {transform_indices = @transform_1, window_bounds = array<i64: 8, 512>}, {transform_indices = @transform_2, window_bounds = array<i64: 8, 512>}, {transform_indices = @transform_3, window_bounds = array<i64: 8, 4>}, {transform_indices = @transform_4, window_bounds = array<i64: 8, 512>}, {transform_indices = @transform_5, window_bounds = array<i64: 8, 512>}, {transform_indices = @transform_6, window_bounds = array<i64: 8, 4>}, {pipeline_mode = #tpu.pipeline_mode<synchronous>, transform_indices = @transform_7, window_bounds = array<i64: 256, 128>}, {pipeline_mode = #tpu.pipeline_mode<synchronous>, transform_indices = @transform_8, window_bounds = array<i64: 1, 128>}, {pipeline_mode = #tpu.pipeline_mode<synchronous>, transform_indices = @transform_9, window_bounds = array<i64: 128, 128>}, {pipeline_mode = #tpu.pipeline_mode<synchronous>, transform_indices = @transform_10, window_bounds = array<i64: 256, 128>}, {pipeline_mode = #tpu.pipeline_mode<synchronous>, transform_indices = @transform_11, window_bounds = array<i64: 1, 128>}, {transform_indices = @transform_12, window_bounds = array<i64: 8, 128>}]} {
    %c0 = arith.constant 0 : index
    %c0_0 = arith.constant 0 : index
    %c0_1 = arith.constant 0 : index
    %0 = vector.load %arg1[%c0, %c0_0, %c0_1] : memref<1x8x128xf32, #tpu.memory_space<vmem>>, vector<1x8x128xf32>
    %1 = vector.shape_cast %0 : vector<1x8x128xf32> to vector<8x128xf32>
    %c0_2 = arith.constant 0 : index
    %c0_3 = arith.constant 0 : index
    %2 = vector.load %arg4[%c0_2, %c0_3] : memref<8x4xf32, #tpu.memory_space<vmem>>, vector<8x4xf32>
    %c0_4 = arith.constant 0 : index
    %c0_5 = arith.constant 0 : index
    %3 = vector.load %arg7[%c0_4, %c0_5] : memref<8x4xf32, #tpu.memory_space<vmem>>, vector<8x4xf32>
    %c0_6 = arith.constant 0 : index
    %c0_7 = arith.constant 0 : index
    %4 = vector.load %arg8[%c0_6, %c0_7] : memref<256x128xf32, #tpu.memory_space<vmem>>, vector<256x128xf32>
    %c0_8 = arith.constant 0 : index
    %c0_9 = arith.constant 0 : index
    %5 = vector.load %arg9[%c0_8, %c0_9] : memref<1x128xf32, #tpu.memory_space<vmem>>, vector<1x128xf32>
    %c0_10 = arith.constant 0 : index
    %c0_11 = arith.constant 0 : index
    %6 = vector.load %arg10[%c0_10, %c0_11] : memref<128x128xf32, #tpu.memory_space<vmem>>, vector<128x128xf32>
    %c0_12 = arith.constant 0 : index
    %c0_13 = arith.constant 0 : index
    %7 = vector.load %arg11[%c0_12, %c0_13] : memref<256x128xf32, #tpu.memory_space<vmem>>, vector<256x128xf32>
    %c0_14 = arith.constant 0 : index
    %c0_15 = arith.constant 0 : index
    %8 = vector.load %arg12[%c0_14, %c0_15] : memref<1x128xf32, #tpu.memory_space<vmem>>, vector<1x128xf32>
    %c0_16 = arith.constant 0 : index
    %c0_17 = arith.constant 0 : index
    %9 = vector.load %arg5[%c0_16, %c0_17] : memref<8x512xf32, #tpu.memory_space<vmem>>, vector<8x128xf32>
    %c0_18 = arith.constant 0 : index
    %c0_19 = arith.constant 0 : index
    %10 = vector.load %arg6[%c0_18, %c0_19] : memref<8x512xf32, #tpu.memory_space<vmem>>, vector<8x128xf32>
    %11 = tpu.concatenate %9, %10 in 1 : vector<8x128xf32>, vector<8x128xf32> -> vector<8x256xf32>
    %cst = arith.constant dense<0.000000e+00> : vector<8x128xf32>
    %12 = tpu.matmul %11, %4, %cst {dimension_numbers = #tpu.dot_dimension_numbers<[1], [0], [0], [1], [0, 0, 1, 1], [], []>} : vector<8x256xf32>, vector<256x128xf32>, vector<8x128xf32> -> vector<8x128xf32>
    %13 = vector.broadcast %5 : vector<1x128xf32> to vector<8x128xf32>
    %14 = arith.addf %12, %13 : vector<8x128xf32>
    %cst_20 = arith.constant dense<0.000000e+00> : vector<8x128xf32>
    %15 = tpu.matmul %14, %6, %cst_20 {dimension_numbers = #tpu.dot_dimension_numbers<[1], [0], [0], [1], [0, 0, 1, 1], [], []>} : vector<8x128xf32>, vector<128x128xf32>, vector<8x128xf32> -> vector<8x128xf32>
    %16 = arith.mulf %15, %1 : vector<8x128xf32>
    %cst_21 = arith.constant dense<0.000000e+00> : vector<8xf32>
    %17 = vector.multi_reduction <add>, %16, %cst_21 [1] : vector<8x128xf32> to vector<8xf32>
    %18 = vector.shape_cast %17 : vector<8xf32> to vector<8x1xf32>
    %c0_22 = arith.constant 0 : index
    %c128 = arith.constant 128 : index
    %19 = vector.load %arg5[%c0_22, %c128] : memref<8x512xf32, #tpu.memory_space<vmem>>, vector<8x128xf32>
    %c0_23 = arith.constant 0 : index
    %c128_24 = arith.constant 128 : index
    %20 = vector.load %arg6[%c0_23, %c128_24] : memref<8x512xf32, #tpu.memory_space<vmem>>, vector<8x128xf32>
    %21 = tpu.concatenate %19, %20 in 1 : vector<8x128xf32>, vector<8x128xf32> -> vector<8x256xf32>
    %cst_25 = arith.constant dense<0.000000e+00> : vector<8x128xf32>
    %22 = tpu.matmul %21, %4, %cst_25 {dimension_numbers = #tpu.dot_dimension_numbers<[1], [0], [0], [1], [0, 0, 1, 1], [], []>} : vector<8x256xf32>, vector<256x128xf32>, vector<8x128xf32> -> vector<8x128xf32>
    %23 = vector.broadcast %5 : vector<1x128xf32> to vector<8x128xf32>
    %24 = arith.addf %22, %23 : vector<8x128xf32>
    %cst_26 = arith.constant dense<0.000000e+00> : vector<8x128xf32>
    %25 = tpu.matmul %24, %6, %cst_26 {dimension_numbers = #tpu.dot_dimension_numbers<[1], [0], [0], [1], [0, 0, 1, 1], [], []>} : vector<8x128xf32>, vector<128x128xf32>, vector<8x128xf32> -> vector<8x128xf32>
    %26 = arith.mulf %25, %1 : vector<8x128xf32>
    %cst_27 = arith.constant dense<0.000000e+00> : vector<8xf32>
    %27 = vector.multi_reduction <add>, %26, %cst_27 [1] : vector<8x128xf32> to vector<8xf32>
    %28 = vector.shape_cast %27 : vector<8xf32> to vector<8x1xf32>
    %c0_28 = arith.constant 0 : index
    %c256 = arith.constant 256 : index
    %29 = vector.load %arg5[%c0_28, %c256] : memref<8x512xf32, #tpu.memory_space<vmem>>, vector<8x128xf32>
    %c0_29 = arith.constant 0 : index
    %c256_30 = arith.constant 256 : index
    %30 = vector.load %arg6[%c0_29, %c256_30] : memref<8x512xf32, #tpu.memory_space<vmem>>, vector<8x128xf32>
    %31 = tpu.concatenate %29, %30 in 1 : vector<8x128xf32>, vector<8x128xf32> -> vector<8x256xf32>
    %cst_31 = arith.constant dense<0.000000e+00> : vector<8x128xf32>
    %32 = tpu.matmul %31, %4, %cst_31 {dimension_numbers = #tpu.dot_dimension_numbers<[1], [0], [0], [1], [0, 0, 1, 1], [], []>} : vector<8x256xf32>, vector<256x128xf32>, vector<8x128xf32> -> vector<8x128xf32>
    %33 = vector.broadcast %5 : vector<1x128xf32> to vector<8x128xf32>
    %34 = arith.addf %32, %33 : vector<8x128xf32>
    %cst_32 = arith.constant dense<0.000000e+00> : vector<8x128xf32>
    %35 = tpu.matmul %34, %6, %cst_32 {dimension_numbers = #tpu.dot_dimension_numbers<[1], [0], [0], [1], [0, 0, 1, 1], [], []>} : vector<8x128xf32>, vector<128x128xf32>, vector<8x128xf32> -> vector<8x128xf32>
    %36 = arith.mulf %35, %1 : vector<8x128xf32>
    %cst_33 = arith.constant dense<0.000000e+00> : vector<8xf32>
    %37 = vector.multi_reduction <add>, %36, %cst_33 [1] : vector<8x128xf32> to vector<8xf32>
    %38 = vector.shape_cast %37 : vector<8xf32> to vector<8x1xf32>
    %c0_34 = arith.constant 0 : index
    %c384 = arith.constant 384 : index
    %39 = vector.load %arg5[%c0_34, %c384] : memref<8x512xf32, #tpu.memory_space<vmem>>, vector<8x128xf32>
    %c0_35 = arith.constant 0 : index
    %c384_36 = arith.constant 384 : index
    %40 = vector.load %arg6[%c0_35, %c384_36] : memref<8x512xf32, #tpu.memory_space<vmem>>, vector<8x128xf32>
    %41 = tpu.concatenate %39, %40 in 1 : vector<8x128xf32>, vector<8x128xf32> -> vector<8x256xf32>
    %cst_37 = arith.constant dense<0.000000e+00> : vector<8x128xf32>
    %42 = tpu.matmul %41, %4, %cst_37 {dimension_numbers = #tpu.dot_dimension_numbers<[1], [0], [0], [1], [0, 0, 1, 1], [], []>} : vector<8x256xf32>, vector<256x128xf32>, vector<8x128xf32> -> vector<8x128xf32>
    %43 = vector.broadcast %5 : vector<1x128xf32> to vector<8x128xf32>
    %44 = arith.addf %42, %43 : vector<8x128xf32>
    %cst_38 = arith.constant dense<0.000000e+00> : vector<8x128xf32>
    %45 = tpu.matmul %44, %6, %cst_38 {dimension_numbers = #tpu.dot_dimension_numbers<[1], [0], [0], [1], [0, 0, 1, 1], [], []>} : vector<8x128xf32>, vector<128x128xf32>, vector<8x128xf32> -> vector<8x128xf32>
    %46 = arith.mulf %45, %1 : vector<8x128xf32>
    %cst_39 = arith.constant dense<0.000000e+00> : vector<8xf32>
    %47 = vector.multi_reduction <add>, %46, %cst_39 [1] : vector<8x128xf32> to vector<8xf32>
    %48 = vector.shape_cast %47 : vector<8xf32> to vector<8x1xf32>
    %49 = tpu.concatenate %18, %28, %38, %48 in 1 : vector<8x1xf32>, vector<8x1xf32>, vector<8x1xf32>, vector<8x1xf32> -> vector<8x4xf32>
    %cst_40 = arith.constant dense<0xFF800000> : vector<8xf32>
    %50 = vector.multi_reduction <maximumf>, %49, %cst_40 [1] : vector<8x4xf32> to vector<8xf32>
    %51 = vector.shape_cast %50 : vector<8xf32> to vector<8x1xf32>
    %52 = vector.broadcast %51 : vector<8x1xf32> to vector<8x4xf32>
    %53 = arith.subf %49, %52 : vector<8x4xf32>
    %54 = math.exp %53 : vector<8x4xf32>
    %cst_41 = arith.constant dense<0.000000e+00> : vector<8xf32>
    %55 = vector.multi_reduction <add>, %54, %cst_41 [1] : vector<8x4xf32> to vector<8xf32>
    %56 = vector.shape_cast %55 : vector<8xf32> to vector<8x1xf32>
    %57 = vector.broadcast %56 : vector<8x1xf32> to vector<8x4xf32>
    %58 = arith.divf %54, %57 : vector<8x4xf32>
    %59 = arith.mulf %58, %3 : vector<8x4xf32>
    %60 = vector.extract_strided_slice %59 {offsets = [0, 0], sizes = [8, 1], strides = [1, 1]} : vector<8x4xf32> to vector<8x1xf32>
    %61 = vector.broadcast %60 : vector<8x1xf32> to vector<8x256xf32>
    %62 = arith.mulf %61, %11 : vector<8x256xf32>
    %63 = vector.extract_strided_slice %59 {offsets = [0, 1], sizes = [8, 1], strides = [1, 1]} : vector<8x4xf32> to vector<8x1xf32>
    %64 = vector.broadcast %63 : vector<8x1xf32> to vector<8x256xf32>
    %65 = arith.mulf %64, %21 : vector<8x256xf32>
    %66 = arith.addf %62, %65 : vector<8x256xf32>
    %67 = vector.extract_strided_slice %59 {offsets = [0, 2], sizes = [8, 1], strides = [1, 1]} : vector<8x4xf32> to vector<8x1xf32>
    %68 = vector.broadcast %67 : vector<8x1xf32> to vector<8x256xf32>
    %69 = arith.mulf %68, %31 : vector<8x256xf32>
    %70 = arith.addf %66, %69 : vector<8x256xf32>
    %71 = vector.extract_strided_slice %59 {offsets = [0, 3], sizes = [8, 1], strides = [1, 1]} : vector<8x4xf32> to vector<8x1xf32>
    %72 = vector.broadcast %71 : vector<8x1xf32> to vector<8x256xf32>
    %73 = arith.mulf %72, %41 : vector<8x256xf32>
    %74 = arith.addf %70, %73 : vector<8x256xf32>
    %c0_42 = arith.constant 0 : index
    %c0_43 = arith.constant 0 : index
    %75 = vector.load %arg2[%c0_42, %c0_43] : memref<8x512xf32, #tpu.memory_space<vmem>>, vector<8x128xf32>
    %c0_44 = arith.constant 0 : index
    %c0_45 = arith.constant 0 : index
    %76 = vector.load %arg3[%c0_44, %c0_45] : memref<8x512xf32, #tpu.memory_space<vmem>>, vector<8x128xf32>
    %77 = tpu.concatenate %75, %76 in 1 : vector<8x128xf32>, vector<8x128xf32> -> vector<8x256xf32>
    %78 = vector.extract_strided_slice %2 {offsets = [0, 0], sizes = [8, 1], strides = [1, 1]} : vector<8x4xf32> to vector<8x1xf32>
    %79 = vector.broadcast %78 : vector<8x1xf32> to vector<8x256xf32>
    %80 = arith.mulf %79, %77 : vector<8x256xf32>
    %c0_46 = arith.constant 0 : index
    %c128_47 = arith.constant 128 : index
    %81 = vector.load %arg2[%c0_46, %c128_47] : memref<8x512xf32, #tpu.memory_space<vmem>>, vector<8x128xf32>
    %c0_48 = arith.constant 0 : index
    %c128_49 = arith.constant 128 : index
    %82 = vector.load %arg3[%c0_48, %c128_49] : memref<8x512xf32, #tpu.memory_space<vmem>>, vector<8x128xf32>
    %83 = tpu.concatenate %81, %82 in 1 : vector<8x128xf32>, vector<8x128xf32> -> vector<8x256xf32>
    %84 = vector.extract_strided_slice %2 {offsets = [0, 1], sizes = [8, 1], strides = [1, 1]} : vector<8x4xf32> to vector<8x1xf32>
    %85 = vector.broadcast %84 : vector<8x1xf32> to vector<8x256xf32>
    %86 = arith.mulf %85, %83 : vector<8x256xf32>
    %87 = arith.addf %80, %86 : vector<8x256xf32>
    %c0_50 = arith.constant 0 : index
    %c256_51 = arith.constant 256 : index
    %88 = vector.load %arg2[%c0_50, %c256_51] : memref<8x512xf32, #tpu.memory_space<vmem>>, vector<8x128xf32>
    %c0_52 = arith.constant 0 : index
    %c256_53 = arith.constant 256 : index
    %89 = vector.load %arg3[%c0_52, %c256_53] : memref<8x512xf32, #tpu.memory_space<vmem>>, vector<8x128xf32>
    %90 = tpu.concatenate %88, %89 in 1 : vector<8x128xf32>, vector<8x128xf32> -> vector<8x256xf32>
    %91 = vector.extract_strided_slice %2 {offsets = [0, 2], sizes = [8, 1], strides = [1, 1]} : vector<8x4xf32> to vector<8x1xf32>
    %92 = vector.broadcast %91 : vector<8x1xf32> to vector<8x256xf32>
    %93 = arith.mulf %92, %90 : vector<8x256xf32>
    %94 = arith.addf %87, %93 : vector<8x256xf32>
    %c0_54 = arith.constant 0 : index
    %c384_55 = arith.constant 384 : index
    %95 = vector.load %arg2[%c0_54, %c384_55] : memref<8x512xf32, #tpu.memory_space<vmem>>, vector<8x128xf32>
    %c0_56 = arith.constant 0 : index
    %c384_57 = arith.constant 384 : index
    %96 = vector.load %arg3[%c0_56, %c384_57] : memref<8x512xf32, #tpu.memory_space<vmem>>, vector<8x128xf32>
    %97 = tpu.concatenate %95, %96 in 1 : vector<8x128xf32>, vector<8x128xf32> -> vector<8x256xf32>
    %98 = vector.extract_strided_slice %2 {offsets = [0, 3], sizes = [8, 1], strides = [1, 1]} : vector<8x4xf32> to vector<8x1xf32>
    %99 = vector.broadcast %98 : vector<8x1xf32> to vector<8x256xf32>
    %100 = arith.mulf %99, %97 : vector<8x256xf32>
    %101 = arith.addf %94, %100 : vector<8x256xf32>
    %cst_58 = arith.constant dense<0.000000e+00> : vector<8x128xf32>
    %102 = tpu.matmul %74, %7, %cst_58 {dimension_numbers = #tpu.dot_dimension_numbers<[1], [0], [0], [1], [0, 0, 1, 1], [], []>} : vector<8x256xf32>, vector<256x128xf32>, vector<8x128xf32> -> vector<8x128xf32>
    %103 = vector.broadcast %8 : vector<1x128xf32> to vector<8x128xf32>
    %104 = arith.addf %102, %103 : vector<8x128xf32>
    %cst_59 = arith.constant dense<0.000000e+00> : vector<8x128xf32>
    %105 = tpu.matmul %101, %7, %cst_59 {dimension_numbers = #tpu.dot_dimension_numbers<[1], [0], [0], [1], [0, 0, 1, 1], [], []>} : vector<8x256xf32>, vector<256x128xf32>, vector<8x128xf32> -> vector<8x128xf32>
    %106 = vector.broadcast %8 : vector<1x128xf32> to vector<8x128xf32>
    %107 = arith.addf %105, %106 : vector<8x128xf32>
    %108 = arith.addf %1, %104 : vector<8x128xf32>
    %109 = arith.addf %108, %107 : vector<8x128xf32>
    %c0_60 = arith.constant 0 : index
    %c0_61 = arith.constant 0 : index
    %110 = vector.load %arg13[%c0_60, %c0_61] : memref<8x128xf32, #tpu.memory_space<vmem>>, vector<8x128xf32>
    tpu.vector_store %arg13[%c0_60, %c0_61], %109 {strides = array<i32>} : memref<8x128xf32, #tpu.memory_space<vmem>>, vector<8x128xf32>,
    return
  }
  func.func @transform_0(%arg0: i32) -> (i32, i32, i32) {
    %c0_i32 = arith.constant 0 : i32
    %c0_i32_0 = arith.constant 0 : i32
    %c0_i32_1 = arith.constant 0 : i32
    return %c0_i32, %arg0, %c0_i32_0 : i32, i32, i32
  }
  func.func @transform_1(%arg0: i32) -> (i32, i32) {
    %c0_i32 = arith.constant 0 : i32
    %c0_i32_0 = arith.constant 0 : i32
    return %arg0, %c0_i32 : i32, i32
  }
  func.func @transform_2(%arg0: i32) -> (i32, i32) {
    %c0_i32 = arith.constant 0 : i32
    %c0_i32_0 = arith.constant 0 : i32
    return %arg0, %c0_i32 : i32, i32
  }
  func.func @transform_3(%arg0: i32) -> (i32, i32) {
    %c0_i32 = arith.constant 0 : i32
    %c0_i32_0 = arith.constant 0 : i32
    return %arg0, %c0_i32 : i32, i32
  }
  func.func @transform_4(%arg0: i32) -> (i32, i32) {
    %c0_i32 = arith.constant 0 : i32
    %c0_i32_0 = arith.constant 0 : i32
    return %arg0, %c0_i32 : i32, i32
  }
  func.func @transform_5(%arg0: i32) -> (i32, i32) {
    %c0_i32 = arith.constant 0 : i32
    %c0_i32_0 = arith.constant 0 : i32
    return %arg0, %c0_i32 : i32, i32
  }
  func.func @transform_6(%arg0: i32) -> (i32, i32) {
    %c0_i32 = arith.constant 0 : i32
    %c0_i32_0 = arith.constant 0 : i32
    return %arg0, %c0_i32 : i32, i32
  }
  func.func @transform_7(%arg0: i32) -> (i32, i32) {
    %c0_i32 = arith.constant 0 : i32
    %c0_i32_0 = arith.constant 0 : i32
    %c0_i32_1 = arith.constant 0 : i32
    return %c0_i32, %c0_i32_0 : i32, i32
  }
  func.func @transform_8(%arg0: i32) -> (i32, i32) {
    %c0_i32 = arith.constant 0 : i32
    %c0_i32_0 = arith.constant 0 : i32
    %c0_i32_1 = arith.constant 0 : i32
    return %c0_i32, %c0_i32_0 : i32, i32
  }
  func.func @transform_9(%arg0: i32) -> (i32, i32) {
    %c0_i32 = arith.constant 0 : i32
    %c0_i32_0 = arith.constant 0 : i32
    %c0_i32_1 = arith.constant 0 : i32
    return %c0_i32, %c0_i32_0 : i32, i32
  }
  func.func @transform_10(%arg0: i32) -> (i32, i32) {
    %c0_i32 = arith.constant 0 : i32
    %c0_i32_0 = arith.constant 0 : i32
    %c0_i32_1 = arith.constant 0 : i32
    return %c0_i32, %c0_i32_0 : i32, i32
  }
  func.func @transform_11(%arg0: i32) -> (i32, i32) {
    %c0_i32 = arith.constant 0 : i32
    %c0_i32_0 = arith.constant 0 : i32
    %c0_i32_1 = arith.constant 0 : i32
    return %c0_i32, %c0_i32_0 : i32, i32
  }
  func.func @transform_12(%arg0: i32) -> (i32, i32) {
    %c0_i32 = arith.constant 0 : i32
    %c0_i32_0 = arith.constant 0 : i32
    return %arg0, %c0_i32 : i32, i32
  }
}

</mosaic_0001>

<llo_original>
// kernel: tpu_custom_call.1
$region0: #{tpu_custom_call.1}
  #allocation0 [shape = 'u32[]', space=smem, size = 0x4, offset = 0x4, fixed_abs, tag = 'smem constant byte address 0x4 - core index']
  #allocation1 [shape = 'u32[144,128]{1,0:T(1,128)}', space=vmem, size = 0x12000, scoped, tag = 'internal scratch']
  %s0 = inlined_call_operand.vmem [shape: f32[1,16,128], index: 0, kind: input, shape index: {}]
  %s1 = inlined_call_operand.hbm [shape: f32[16,512], index: 1, kind: input, shape index: {}]
  %s2 = inlined_call_operand.hbm [shape: f32[16,512], index: 2, kind: input, shape index: {}]
  %s3 = inlined_call_operand.vmem [shape: f32[16,4], index: 3, kind: input, shape index: {}]
  %s4 = inlined_call_operand.hbm [shape: f32[16,512], index: 4, kind: input, shape index: {}]
  %s5 = inlined_call_operand.hbm [shape: f32[16,512], index: 5, kind: input, shape index: {}]
  %s6 = inlined_call_operand.vmem [shape: f32[16,4], index: 6, kind: input, shape index: {}]
  %s7 = inlined_call_operand.hbm [shape: f32[256,128], index: 7, kind: input, shape index: {}]
  %s8 = inlined_call_operand.vmem [shape: f32[1,128], index: 8, kind: input, shape index: {}]
  %s9 = inlined_call_operand.hbm [shape: f32[128,128], index: 9, kind: input, shape index: {}]
  %s10 = inlined_call_operand.hbm [shape: f32[256,128], index: 10, kind: input, shape index: {}]
  %s11 = inlined_call_operand.vmem [shape: f32[1,128], index: 11, kind: input, shape index: {}]
  %s12 = inlined_call_operand.hbm [shape: f32[16,128], index: 12, kind: output, shape index: {}]
  %s13 = sld [smem:[#allocation0]]
  $region109: #{tpu_custom_call.1} parent=0
    _
  %s15 = ssub.s32 1, %s13
  %s16 = scalar_select 0, %s15, %s13
  $region1: #{tpu_custom_call.1} parent=0
    #allocation2 [shape = 'u8[32768]{0}', space=vmem, size = 0x8000, scoped, tag = 'input window, operand 1']
    #allocation3 [shape = 's32[2]{0}', space=sflag, size = 0x8, scoped, tag = 'scoped memory for tpu_custom_call.1']
    #allocation4 [shape = 's32[2]{0}', space=sflag, size = 0x8, scoped, tag = 'scoped memory for tpu_custom_call.1']
    #allocation5 [shape = 'u8[32768]{0}', space=vmem, size = 0x8000, scoped, tag = 'input window, operand 2']
    #allocation6 [shape = 's32[2]{0}', space=sflag, size = 0x8, scoped, tag = 'scoped memory for tpu_custom_call.1']
    #allocation7 [shape = 'u8[32768]{0}', space=vmem, size = 0x8000, scoped, tag = 'input window, operand 4']
    #allocation8 [shape = 'u8[32768]{0}', space=vmem, size = 0x8000, scoped, tag = 'input window, operand 5']
    #allocation9 [shape = 's32[2]{0}', space=sflag, size = 0x8, scoped, tag = 'scoped memory for tpu_custom_call.1']
    #allocation10 [shape = 'u8[131072]{0}', space=vmem, size = 0x20000, scoped, tag = 'input window, operand 7, single buffered']
    #allocation11 [shape = 'u8[65536]{0}', space=vmem, size = 0x10000, scoped, tag = 'input window, operand 9, single buffered']
    #allocation12 [shape = 's32[1]{0}', space=sflag, size = 0x4, scoped, tag = 'scoped memory for tpu_custom_call.1']
    #allocation13 [shape = 'u8[131072]{0}', space=vmem, size = 0x20000, scoped, tag = 'input window, operand 10, single buffered']
    #allocation14 [shape = 'u8[8192]{0}', space=vmem, size = 0x2000, scoped, tag = 'output window, operand 0']
    %17 = vsyncpa [#allocation3], 0
    %s18 = scalar_lea.sflag [#allocation3], 1
    %19 = vsyncpa %s18, 0
    %20 = vsyncpa [#allocation6], 0
    %s21 = scalar_lea.sflag [#allocation6], 1
    %22 = vsyncpa %s21, 0
    %23 = vsyncpa [#allocation9], 0
    %s24 = scalar_lea.sflag [#allocation9], 1
    %25 = vsyncpa %s24, 0
    %26 = vsyncpa [#allocation12], 0
    %27 = vsyncpa [#allocation4], 0
    %s28 = scalar_lea.sflag [#allocation4], 1
    %29 = vsyncpa %s28, 0
    loop: start=0, step=1, limit=4
    $region2: #{tpu_custom_call.1} parent=1 // loop_pre_header
      _
    $region3: #{tpu_custom_call.1} parent=1 // loop_header
      %s31 = sphi 0, %s35
      %p32 = scmp.ge.s32.totalorder %s31, 4
      %s41 = sphi 0, %s43
      %s44 = sphi 0, %s41
      %s45 = sphi 0, %s44
      %s61 = sphi 0, %s45
      %s67 = sphi 0, %s69
      %s70 = sphi 0, %s67
      %s71 = sphi 0, %s70
      %s87 = sphi 0, %s71
      %s93 = sphi 0, %s95
      %s96 = sphi 0, %s93
      %s97 = sphi 0, %s96
      %s113 = sphi 0, %s97
      %s119 = sphi 0, %s121
      %s122 = sphi 0, %s119
      %s123 = sphi 0, %s122
      %s139 = sphi 0, %s123
      %s145 = sphi 0, %s147
      %s148 = sphi 0, %s145
      %s149 = sphi 0, %s148
      %s165 = sphi 0, %s149
      %s171 = sphi 0, %s173
      %s174 = sphi 0, %s171
      %s175 = sphi 0, %s174
      %s191 = sphi 0, %s175
      %s197 = sphi 0, %s199
      %s200 = sphi 0, %s197
      %s201 = sphi 0, %s200
      %s217 = sphi 0, %s201
      %s221 = sphi 0, %s221
      %s223 = sphi 0, %s221
      %s224 = sphi 0, %s223
      %s238 = sphi 0, %s224
      %s242 = sphi 0, %s242
      %s244 = sphi 0, %s242
      %s245 = sphi 0, %s244
      %s259 = sphi 0, %s245
      %s263 = sphi 0, %s263
      %s265 = sphi 0, %s263
      %s266 = sphi 0, %s265
      %s280 = sphi 0, %s266
      %s284 = sphi 0, %s284
      %s286 = sphi 0, %s284
      %s287 = sphi 0, %s286
      %s301 = sphi 0, %s287
      %s305 = sphi 0, %s305
      %s307 = sphi 0, %s305
      %s308 = sphi 0, %s307
      %s322 = sphi 0, %s308
      %s328 = sphi 0, %s330
      %s331 = sphi 0, %s328
      %s332 = sphi 0, %s331
      %s348 = sphi 0, %s332
    $region4: #{tpu_custom_call.1} parent=1 // loop_header_branch
      %34 = sbr.rel (%p32) target = $region8
    $region5: #{tpu_custom_call.1} parent=1 // loop_body
      %s36 = ssub.s32 %s31, 1
      %s37 = ssub.s32 %s31, 2
      %s38 = sadd.s32 %s31, 1
      %s39 = ssub.s32 %s31, %s38
      %p40 = scmp.eq.s32.totalorder %s39, 0
      %s42 = sadd.s32 %s41, 1
      %s43 = scalar_select %p40, %s41, %s42
      %p46 = pneg %p40
      %p47 = scmp.eq.s32.totalorder %s31, 1
      %p48 = por %p46, %p47
      %p49 = scmp.ne.s32.totalorder %s41, %s44
      %p50 = scmp.eq.s32.totalorder %s31, 0
      %p51 = por %p49, %p50
      %p52 = scmp.ne.s32.totalorder %s41, %s44
      %p53 = scmp.eq.s32.totalorder %s36, 1
      %p54 = por %p52, %p53
      %p55 = scmp.ne.s32.totalorder %s44, %s45
      %p56 = scmp.eq.s32.totalorder %s36, 0
      %p57 = por %p55, %p56
      %p58 = scmp.ne.s32.totalorder %s44, %s45
      %p59 = scmp.eq.s32.totalorder %s37, 1
      %p60 = por %p58, %p59
      %p62 = scmp.ne.s32.totalorder %s45, %s61
      %p63 = scmp.eq.s32.totalorder %s37, 0
      %p64 = por %p62, %p63
      %s65 = ssub.s32 %s31, %s38
      %p66 = scmp.eq.s32.totalorder %s65, 0
      %s68 = sadd.s32 %s67, 1
      %s69 = scalar_select %p66, %s67, %s68
      %p72 = pneg %p66
      %p73 = scmp.eq.s32.totalorder %s31, 1
      %p74 = por %p72, %p73
      %p75 = scmp.ne.s32.totalorder %s67, %s70
      %p76 = scmp.eq.s32.totalorder %s31, 0
      %p77 = por %p75, %p76
      %p78 = scmp.ne.s32.totalorder %s67, %s70
      %p79 = scmp.eq.s32.totalorder %s36, 1
      %p80 = por %p78, %p79
      %p81 = scmp.ne.s32.totalorder %s70, %s71
      %p82 = scmp.eq.s32.totalorder %s36, 0
      %p83 = por %p81, %p82
      %p84 = scmp.ne.s32.totalorder %s70, %s71
      %p85 = scmp.eq.s32.totalorder %s37, 1
      %p86 = por %p84, %p85
      %p88 = scmp.ne.s32.totalorder %s71, %s87
      %p89 = scmp.eq.s32.totalorder %s37, 0
      %p90 = por %p88, %p89
      %s91 = ssub.s32 %s31, %s38
      %p92 = scmp.eq.s32.totalorder %s91, 0
      %s94 = sadd.s32 %s93, 1
      %s95 = scalar_select %p92, %s93, %s94
      %p98 = pneg %p92
      %p99 = scmp.eq.s32.totalorder %s31, 1
      %p100 = por %p98, %p99
      %p101 = scmp.ne.s32.totalorder %s93, %s96
      %p102 = scmp.eq.s32.totalorder %s31, 0
      %p103 = por %p101, %p102
      %p104 = scmp.ne.s32.totalorder %s93, %s96
      %p105 = scmp.eq.s32.totalorder %s36, 1
      %p106 = por %p104, %p105
      %p107 = scmp.ne.s32.totalorder %s96, %s97
      %p108 = scmp.eq.s32.totalorder %s36, 0
      %p109 = por %p107, %p108
      %p110 = scmp.ne.s32.totalorder %s96, %s97
      %p111 = scmp.eq.s32.totalorder %s37, 1
      %p112 = por %p110, %p111
      %p114 = scmp.ne.s32.totalorder %s97, %s113
      %p115 = scmp.eq.s32.totalorder %s37, 0
      %p116 = por %p114, %p115
      %s117 = ssub.s32 %s31, %s38
      %p118 = scmp.eq.s32.totalorder %s117, 0
      %s120 = sadd.s32 %s119, 1
      %s121 = scalar_select %p118, %s119, %s120
      %p124 = pneg %p118
      %p125 = scmp.eq.s32.totalorder %s31, 1
      %p126 = por %p124, %p125
      %p127 = scmp.ne.s32.totalorder %s119, %s122
      %p128 = scmp.eq.s32.totalorder %s31, 0
      %p129 = por %p127, %p128
      %p130 = scmp.ne.s32.totalorder %s119, %s122
      %p131 = scmp.eq.s32.totalorder %s36, 1
      %p132 = por %p130, %p131
      %p133 = scmp.ne.s32.totalorder %s122, %s123
      %p134 = scmp.eq.s32.totalorder %s36, 0
      %p135 = por %p133, %p134
      %p136 = scmp.ne.s32.totalorder %s122, %s123
      %p137 = scmp.eq.s32.totalorder %s37, 1
      %p138 = por %p136, %p137
      %p140 = scmp.ne.s32.totalorder %s123, %s139
      %p141 = scmp.eq.s32.totalorder %s37, 0
      %p142 = por %p140, %p141
      %s143 = ssub.s32 %s31, %s38
      %p144 = scmp.eq.s32.totalorder %s143, 0
      %s146 = sadd.s32 %s145, 1
      %s147 = scalar_select %p144, %s145, %s146
      %p150 = pneg %p144
      %p151 = scmp.eq.s32.totalorder %s31, 1
      %p152 = por %p150, %p151
      %p153 = scmp.ne.s32.totalorder %s145, %s148
      %p154 = scmp.eq.s32.totalorder %s31, 0
      %p155 = por %p153, %p154
      %p156 = scmp.ne.s32.totalorder %s145, %s148
      %p157 = scmp.eq.s32.totalorder %s36, 1
      %p158 = por %p156, %p157
      %p159 = scmp.ne.s32.totalorder %s148, %s149
      %p160 = scmp.eq.s32.totalorder %s36, 0
      %p161 = por %p159, %p160
      %p162 = scmp.ne.s32.totalorder %s148, %s149
      %p163 = scmp.eq.s32.totalorder %s37, 1
      %p164 = por %p162, %p163
      %p166 = scmp.ne.s32.totalorder %s149, %s165
      %p167 = scmp.eq.s32.totalorder %s37, 0
      %p168 = por %p166, %p167
      %s169 = ssub.s32 %s31, %s38
      %p170 = scmp.eq.s32.totalorder %s169, 0
      %s172 = sadd.s32 %s171, 1
      %s173 = scalar_select %p170, %s171, %s172
      %p176 = pneg %p170
      %p177 = scmp.eq.s32.totalorder %s31, 1
      %p178 = por %p176, %p177
      %p179 = scmp.ne.s32.totalorder %s171, %s174
      %p180 = scmp.eq.s32.totalorder %s31, 0
      %p181 = por %p179, %p180
      %p182 = scmp.ne.s32.totalorder %s171, %s174
      %p183 = scmp.eq.s32.totalorder %s36, 1
      %p184 = por %p182, %p183
      %p185 = scmp.ne.s32.totalorder %s174, %s175
      %p186 = scmp.eq.s32.totalorder %s36, 0
      %p187 = por %p185, %p186
      %p188 = scmp.ne.s32.totalorder %s174, %s175
      %p189 = scmp.eq.s32.totalorder %s37, 1
      %p190 = por %p188, %p189
      %p192 = scmp.ne.s32.totalorder %s175, %s191
      %p193 = scmp.eq.s32.totalorder %s37, 0
      %p194 = por %p192, %p193
      %s195 = ssub.s32 %s31, %s38
      %p196 = scmp.eq.s32.totalorder %s195, 0
      %s198 = sadd.s32 %s197, 1
      %s199 = scalar_select %p196, %s197, %s198
      %p202 = pneg %p196
      %p203 = scmp.eq.s32.totalorder %s31, 1
      %p204 = por %p202, %p203
      %p205 = scmp.ne.s32.totalorder %s197, %s200
      %p206 = scmp.eq.s32.totalorder %s31, 0
      %p207 = por %p205, %p206
      %p208 = scmp.ne.s32.totalorder %s197, %s200
      %p209 = scmp.eq.s32.totalorder %s36, 1
      %p210 = por %p208, %p209
      %p211 = scmp.ne.s32.totalorder %s200, %s201
      %p212 = scmp.eq.s32.totalorder %s36, 0
      %p213 = por %p211, %p212
      %p214 = scmp.ne.s32.totalorder %s200, %s201
      %p215 = scmp.eq.s32.totalorder %s37, 1
      %p216 = por %p214, %p215
      %p218 = scmp.ne.s32.totalorder %s201, %s217
      %p219 = scmp.eq.s32.totalorder %s37, 0
      %p220 = por %p218, %p219
      %s222 = sadd.s32 %s221, 1
      %p225 = scmp.eq.s32.totalorder %s31, 1
      %p226 = scmp.ne.s32.totalorder %s221, %s223
      %p227 = scmp.eq.s32.totalorder %s31, 0
      %p228 = por %p226, %p227
      %p229 = scmp.ne.s32.totalorder %s221, %s223
      %p230 = scmp.eq.s32.totalorder %s36, 1
      %p231 = por %p229, %p230
      %p232 = scmp.ne.s32.totalorder %s223, %s224
      %p233 = scmp.eq.s32.totalorder %s36, 0
      %p234 = por %p232, %p233
      %p235 = scmp.ne.s32.totalorder %s223, %s224
      %p236 = scmp.eq.s32.totalorder %s37, 1
      %p237 = por %p235, %p236
      %p239 = scmp.ne.s32.totalorder %s224, %s238
      %p240 = scmp.eq.s32.totalorder %s37, 0
      %p241 = por %p239, %p240
      %s243 = sadd.s32 %s242, 1
      %p246 = scmp.eq.s32.totalorder %s31, 1
      %p247 = scmp.ne.s32.totalorder %s242, %s244
      %p248 = scmp.eq.s32.totalorder %s31, 0
      %p249 = por %p247, %p248
      %p250 = scmp.ne.s32.totalorder %s242, %s244
      %p251 = scmp.eq.s32.totalorder %s36, 1
      %p252 = por %p250, %p251
      %p253 = scmp.ne.s32.totalorder %s244, %s245
      %p254 = scmp.eq.s32.totalorder %s36, 0
      %p255 = por %p253, %p254
      %p256 = scmp.ne.s32.totalorder %s244, %s245
      %p257 = scmp.eq.s32.totalorder %s37, 1
      %p258 = por %p256, %p257
      %p260 = scmp.ne.s32.totalorder %s245, %s259
      %p261 = scmp.eq.s32.totalorder %s37, 0
      %p262 = por %p260, %p261
      %s264 = sadd.s32 %s263, 1
      %p267 = scmp.eq.s32.totalorder %s31, 1
      %p268 = scmp.ne.s32.totalorder %s263, %s265
      %p269 = scmp.eq.s32.totalorder %s31, 0
      %p270 = por %p268, %p269
      %p271 = scmp.ne.s32.totalorder %s263, %s265
      %p272 = scmp.eq.s32.totalorder %s36, 1
      %p273 = por %p271, %p272
      %p274 = scmp.ne.s32.totalorder %s265, %s266
      %p275 = scmp.eq.s32.totalorder %s36, 0
      %p276 = por %p274, %p275
      %p277 = scmp.ne.s32.totalorder %s265, %s266
      %p278 = scmp.eq.s32.totalorder %s37, 1
      %p279 = por %p277, %p278
      %p281 = scmp.ne.s32.totalorder %s266, %s280
      %p282 = scmp.eq.s32.totalorder %s37, 0
      %p283 = por %p281, %p282
      %s285 = sadd.s32 %s284, 1
      %p288 = scmp.eq.s32.totalorder %s31, 1
      %p289 = scmp.ne.s32.totalorder %s284, %s286
      %p290 = scmp.eq.s32.totalorder %s31, 0
      %p291 = por %p289, %p290
      %p292 = scmp.ne.s32.totalorder %s284, %s286
      %p293 = scmp.eq.s32.totalorder %s36, 1
      %p294 = por %p292, %p293
      %p295 = scmp.ne.s32.totalorder %s286, %s287
      %p296 = scmp.eq.s32.totalorder %s36, 0
      %p297 = por %p295, %p296
      %p298 = scmp.ne.s32.totalorder %s286, %s287
      %p299 = scmp.eq.s32.totalorder %s37, 1
      %p300 = por %p298, %p299
      %p302 = scmp.ne.s32.totalorder %s287, %s301
      %p303 = scmp.eq.s32.totalorder %s37, 0
      %p304 = por %p302, %p303
      %s306 = sadd.s32 %s305, 1
      %p309 = scmp.eq.s32.totalorder %s31, 1
      %p310 = scmp.ne.s32.totalorder %s305, %s307
      %p311 = scmp.eq.s32.totalorder %s31, 0
      %p312 = por %p310, %p311
      %p313 = scmp.ne.s32.totalorder %s305, %s307
      %p314 = scmp.eq.s32.totalorder %s36, 1
      %p315 = por %p313, %p314
      %p316 = scmp.ne.s32.totalorder %s307, %s308
      %p317 = scmp.eq.s32.totalorder %s36, 0
      %p318 = por %p316, %p317
      %p319 = scmp.ne.s32.totalorder %s307, %s308
      %p320 = scmp.eq.s32.totalorder %s37, 1
      %p321 = por %p319, %p320
      %p323 = scmp.ne.s32.totalorder %s308, %s322
      %p324 = scmp.eq.s32.totalorder %s37, 0
      %p325 = por %p323, %p324
      %s326 = ssub.s32 %s31, %s38
      %p327 = scmp.eq.s32.totalorder %s326, 0
      %s329 = sadd.s32 %s328, 1
      %s330 = scalar_select %p327, %s328, %s329
      %p333 = pneg %p327
      %p334 = scmp.eq.s32.totalorder %s31, 1
      %p335 = por %p333, %p334
      %p336 = scmp.ne.s32.totalorder %s328, %s331
      %p337 = scmp.eq.s32.totalorder %s31, 0
      %p338 = por %p336, %p337
      %p339 = scmp.ne.s32.totalorder %s328, %s331
      %p340 = scmp.eq.s32.totalorder %s36, 1
      %p341 = por %p339, %p340
      %p342 = scmp.ne.s32.totalorder %s331, %s332
      %p343 = scmp.eq.s32.totalorder %s36, 0
      %p344 = por %p342, %p343
      %p345 = scmp.ne.s32.totalorder %s331, %s332
      %p346 = scmp.eq.s32.totalorder %s37, 1
      %p347 = por %p345, %p346
      %p349 = scmp.ne.s32.totalorder %s332, %s348
      %p350 = scmp.eq.s32.totalorder %s37, 0
      %p351 = por %p349, %p350
      %p352 = scmp.le.s32.totalorder 1, %s31
      %p353 = scmp.lt.s32.totalorder %s31, 3
      %p354 = pnand %p352, %p353
      %p355 = pneg %p354
      // Predicated region
      $region9: #{tpu_custom_call.1} parent=5 // pred_check
        _
      $region10: #{tpu_custom_call.1} parent=5 // pred_check_branch
        %357 = sbr.rel (%p354) target = $region12
      $region11: #{tpu_custom_call.1} parent=5 // pred_region
        %s358 = ssub.s32 %s31, 1
        // Predicated region
        $region13: #{tpu_custom_call.1} parent=11 // pred_check
          %p359 = pneg %p234
        $region14: #{tpu_custom_call.1} parent=11 // pred_check_branch
          %361 = sbr.rel (%p359) target = $region16
        $region15: #{tpu_custom_call.1} parent=11 // pred_region
          %s363 = ssub.s32 4096, 4096
          %364 = vsyncadd [#allocation9], %s363
          %s365 = sshll.u32 [#allocation10], 4
          %s366 = int_to_ptr.vmem [resolvable:$true] %s365
          %371 = dma.hbm_to_vmem [thread:$0]  %s7, 4096, %s366, [#allocation9], 128, 128, 8
        $region16: #{tpu_custom_call.1} parent=11 // pred_fallthru
          _
        // Predicated region
        $region17: #{tpu_custom_call.1} parent=11 // pred_check
          %p372 = pneg %p255
        $region18: #{tpu_custom_call.1} parent=11 // pred_check_branch
          %374 = sbr.rel (%p372) target = $region20
        $region19: #{tpu_custom_call.1} parent=11 // pred_region
          _
        $region20: #{tpu_custom_call.1} parent=11 // pred_fallthru
          _
        // Predicated region
        $region21: #{tpu_custom_call.1} parent=11 // pred_check
          %p375 = pneg %p276
        $region22: #{tpu_custom_call.1} parent=11 // pred_check_branch
          %377 = sbr.rel (%p375) target = $region24
        $region23: #{tpu_custom_call.1} parent=11 // pred_region
          %s379 = ssub.s32 2048, 2048
          %380 = vsyncadd [#allocation12], %s379
          %s381 = sshll.u32 [#allocation11], 4
          %s382 = int_to_ptr.vmem [resolvable:$true] %s381
          %387 = dma.hbm_to_vmem [thread:$0]  %s9, 2048, %s382, [#allocation12], 128, 128, 8
        $region24: #{tpu_custom_call.1} parent=11 // pred_fallthru
          _
        // Predicated region
        $region25: #{tpu_custom_call.1} parent=11 // pred_check
          %p388 = pneg %p297
        $region26: #{tpu_custom_call.1} parent=11 // pred_check_branch
          %390 = sbr.rel (%p388) target = $region28
        $region27: #{tpu_custom_call.1} parent=11 // pred_region
          %s392 = ssub.s32 4096, 4096
          %393 = vsyncadd [#allocation12], %s392
          %s394 = sshll.u32 [#allocation13], 4
          %s395 = int_to_ptr.vmem [resolvable:$true] %s394
          %400 = dma.hbm_to_vmem [thread:$0]  %s10, 4096, %s395, [#allocation12], 128, 128, 8
        $region28: #{tpu_custom_call.1} parent=11 // pred_fallthru
          _
        // Predicated region
        $region29: #{tpu_custom_call.1} parent=11 // pred_check
          %p401 = pneg %p318
        $region30: #{tpu_custom_call.1} parent=11 // pred_check_branch
          %403 = sbr.rel (%p401) target = $region32
        $region31: #{tpu_custom_call.1} parent=11 // pred_region
          _
        $region32: #{tpu_custom_call.1} parent=11 // pred_fallthru
          _
      $region12: #{tpu_custom_call.1} parent=5 // pred_fallthru
        _
      %p404 = scmp.lt.s32.totalorder %s31, 2
      // Predicated region
      $region33: #{tpu_custom_call.1} parent=5 // pred_check
        %p405 = pneg %p404
      $region34: #{tpu_custom_call.1} parent=5 // pred_check_branch
        %407 = sbr.rel (%p405) target = $region36
      $region35: #{tpu_custom_call.1} parent=5 // pred_region
        // Predicated region
        $region37: #{tpu_custom_call.1} parent=35 // pred_check
          %p408 = pneg %p51
        $region38: #{tpu_custom_call.1} parent=35 // pred_check_branch
          %410 = sbr.rel (%p408) target = $region40
        $region39: #{tpu_custom_call.1} parent=35 // pred_region
          %p411 = scmp.lt.s32.totalorder %s31, 1
          %s412 = scalar_select %p411, %s31, 1
          %s413 = smul.addr %s412, 8
          %s414 = scalar_lea.vmem %s0, %s413
        $region40: #{tpu_custom_call.1} parent=35 // pred_fallthru
          _
        // Predicated region
        $region41: #{tpu_custom_call.1} parent=35 // pred_check
          %p415 = pneg %p77
        $region42: #{tpu_custom_call.1} parent=35 // pred_check_branch
          %417 = sbr.rel (%p415) target = $region44
        $region43: #{tpu_custom_call.1} parent=35 // pred_region
          %s418 = sand.u32 %s67, 1
          %s419 = scalar_lea.sflag [#allocation3], %s418
          %s420 = sand.u32 %s67, 1
          %s421 = smul.addr %s420, 32
          %s422 = scalar_lea.vmem [#allocation2], %s421
          %s424 = ssub.s32 512, 512
          %425 = vsyncadd %s419, %s424
          %s426 = smul.addr %s31, 4
          %s427 = smul.addr %s426, 128
          %s428 = scalar_lea.hbm %s1, %s427
          %s430 = sshll.u32 %s422, 4
          %s431 = int_to_ptr.vmem [resolvable:$true] %s430
          %433 = dma.hbm_to_vmem [thread:$0]  %s428, 512, %s431, %s419
        $region44: #{tpu_custom_call.1} parent=35 // pred_fallthru
          _
        // Predicated region
        $region45: #{tpu_custom_call.1} parent=35 // pred_check
          %p434 = pneg %p103
        $region46: #{tpu_custom_call.1} parent=35 // pred_check_branch
          %436 = sbr.rel (%p434) target = $region48
        $region47: #{tpu_custom_call.1} parent=35 // pred_region
          %s437 = sand.u32 %s31, 1
          %s438 = scalar_lea.sflag [#allocation6], %s437
          %s439 = sand.u32 %s93, 1
          %s440 = smul.addr %s439, 32
          %s441 = scalar_lea.vmem [#allocation5], %s440
          %s443 = ssub.s32 512, 512
          %444 = vsyncadd %s438, %s443
          %s445 = smul.addr %s31, 4
          %s446 = smul.addr %s445, 128
          %s447 = scalar_lea.hbm %s2, %s446
          %s449 = sshll.u32 %s441, 4
          %s450 = int_to_ptr.vmem [resolvable:$true] %s449
          %452 = dma.hbm_to_vmem [thread:$0]  %s447, 512, %s450, %s438
        $region48: #{tpu_custom_call.1} parent=35 // pred_fallthru
          _
        // Predicated region
        $region49: #{tpu_custom_call.1} parent=35 // pred_check
          %p453 = pneg %p129
        $region50: #{tpu_custom_call.1} parent=35 // pred_check_branch
          %455 = sbr.rel (%p453) target = $region52
        $region51: #{tpu_custom_call.1} parent=35 // pred_region
          %p456 = scmp.lt.s32.totalorder %s31, 1
          %s457 = scalar_select %p456, %s31, 1
          %s458 = smul.addr %s457, 8
          %s459 = scalar_lea.vmem %s3, %s458
        $region52: #{tpu_custom_call.1} parent=35 // pred_fallthru
          _
        // Predicated region
        $region53: #{tpu_custom_call.1} parent=35 // pred_check
          %p460 = pneg %p155
        $region54: #{tpu_custom_call.1} parent=35 // pred_check_branch
          %462 = sbr.rel (%p460) target = $region56
        $region55: #{tpu_custom_call.1} parent=35 // pred_region
          %s463 = sand.u32 %s31, 1
          %s464 = scalar_lea.sflag [#allocation6], %s463
          %s465 = sand.u32 %s145, 1
          %s466 = smul.addr %s465, 32
          %s467 = scalar_lea.vmem [#allocation7], %s466
          %s469 = ssub.s32 512, 512
          %470 = vsyncadd %s464, %s469
          %s471 = smul.addr %s31, 4
          %s472 = smul.addr %s471, 128
          %s473 = scalar_lea.hbm %s4, %s472
          %s475 = sshll.u32 %s467, 4
          %s476 = int_to_ptr.vmem [resolvable:$true] %s475
          %478 = dma.hbm_to_vmem [thread:$0]  %s473, 512, %s476, %s464
        $region56: #{tpu_custom_call.1} parent=35 // pred_fallthru
          _
        // Predicated region
        $region57: #{tpu_custom_call.1} parent=35 // pred_check
          %p479 = pneg %p181
        $region58: #{tpu_custom_call.1} parent=35 // pred_check_branch
          %481 = sbr.rel (%p479) target = $region60
        $region59: #{tpu_custom_call.1} parent=35 // pred_region
          %s482 = sand.u32 %s31, 1
          %s483 = scalar_lea.sflag [#allocation9], %s482
          %s484 = sand.u32 %s171, 1
          %s485 = smul.addr %s484, 32
          %s486 = scalar_lea.vmem [#allocation8], %s485
          %s488 = ssub.s32 512, 512
          %489 = vsyncadd %s483, %s488
          %s490 = smul.addr %s31, 4
          %s491 = smul.addr %s490, 128
          %s492 = scalar_lea.hbm %s5, %s491
          %s494 = sshll.u32 %s486, 4
          %s495 = int_to_ptr.vmem [resolvable:$true] %s494
          %497 = dma.hbm_to_vmem [thread:$0]  %s492, 512, %s495, %s483
        $region60: #{tpu_custom_call.1} parent=35 // pred_fallthru
          _
        // Predicated region
        $region61: #{tpu_custom_call.1} parent=35 // pred_check
          %p498 = pneg %p207
        $region62: #{tpu_custom_call.1} parent=35 // pred_check_branch
          %500 = sbr.rel (%p498) target = $region64
        $region63: #{tpu_custom_call.1} parent=35 // pred_region
          %p501 = scmp.lt.s32.totalorder %s31, 1
          %s502 = scalar_select %p501, %s31, 1
          %s503 = smul.addr %s502, 8
          %s504 = scalar_lea.vmem %s6, %s503
        $region64: #{tpu_custom_call.1} parent=35 // pred_fallthru
          _
      $region36: #{tpu_custom_call.1} parent=5 // pred_fallthru
        _
      %p505 = scmp.le.s32.totalorder 1, %s31
      %p506 = scmp.lt.s32.totalorder %s31, 3
      %p507 = pnand %p505, %p506
      %p508 = pneg %p507
      // Predicated region
      $region65: #{tpu_custom_call.1} parent=5 // pred_check
        _
      $region66: #{tpu_custom_call.1} parent=5 // pred_check_branch
        %510 = sbr.rel (%p507) target = $region68
      $region67: #{tpu_custom_call.1} parent=5 // pred_region
        %s511 = ssub.s32 %s31, 1
        %s512 = sand.u32 %s70, 1
        %s513 = scalar_lea.sflag [#allocation3], %s512
        %s514 = sand.u32 %s70, 1
        %s515 = smul.addr %s514, 32
        %s516 = scalar_lea.vmem [#allocation2], %s515
        // Predicated region
        $region69: #{tpu_custom_call.1} parent=67 // pred_check
          %p517 = pneg %p83
        $region70: #{tpu_custom_call.1} parent=67 // pred_check_branch
          %519 = sbr.rel (%p517) target = $region72
        $region71: #{tpu_custom_call.1} parent=67 // pred_region
          %520 = dma.done %s513, 512
        $region72: #{tpu_custom_call.1} parent=67 // pred_fallthru
          _
        %s521 = sand.u32 %s36, 1
        %s522 = scalar_lea.sflag [#allocation6], %s521
        %s523 = sand.u32 %s96, 1
        %s524 = smul.addr %s523, 32
        %s525 = scalar_lea.vmem [#allocation5], %s524
        // Predicated region
        $region73: #{tpu_custom_call.1} parent=67 // pred_check
          %p526 = pneg %p109
        $region74: #{tpu_custom_call.1} parent=67 // pred_check_branch
          %528 = sbr.rel (%p526) target = $region76
        $region75: #{tpu_custom_call.1} parent=67 // pred_region
          %529 = dma.done %s522, 512
        $region76: #{tpu_custom_call.1} parent=67 // pred_fallthru
          _
        %s530 = sand.u32 %s36, 1
        %s531 = scalar_lea.sflag [#allocation6], %s530
        %s532 = sand.u32 %s148, 1
        %s533 = smul.addr %s532, 32
        %s534 = scalar_lea.vmem [#allocation7], %s533
        // Predicated region
        $region77: #{tpu_custom_call.1} parent=67 // pred_check
          %p535 = pneg %p161
        $region78: #{tpu_custom_call.1} parent=67 // pred_check_branch
          %537 = sbr.rel (%p535) target = $region80
        $region79: #{tpu_custom_call.1} parent=67 // pred_region
          %538 = dma.done %s531, 512
        $region80: #{tpu_custom_call.1} parent=67 // pred_fallthru
          _
        %s539 = sand.u32 %s36, 1
        %s540 = scalar_lea.sflag [#allocation9], %s539
        %s541 = sand.u32 %s174, 1
        %s542 = smul.addr %s541, 32
        %s543 = scalar_lea.vmem [#allocation8], %s542
        // Predicated region
        $region81: #{tpu_custom_call.1} parent=67 // pred_check
          %p544 = pneg %p187
        $region82: #{tpu_custom_call.1} parent=67 // pred_check_branch
          %546 = sbr.rel (%p544) target = $region84
        $region83: #{tpu_custom_call.1} parent=67 // pred_region
          %547 = dma.done %s540, 512
        $region84: #{tpu_custom_call.1} parent=67 // pred_fallthru
          _
        // Predicated region
        $region85: #{tpu_custom_call.1} parent=67 // pred_check
          %p548 = pneg %p234
        $region86: #{tpu_custom_call.1} parent=67 // pred_check_branch
          %550 = sbr.rel (%p548) target = $region88
        $region87: #{tpu_custom_call.1} parent=67 // pred_region
          %551 = dma.done [#allocation9], 4096
        $region88: #{tpu_custom_call.1} parent=67 // pred_fallthru
          _
        // Predicated region
        $region89: #{tpu_custom_call.1} parent=67 // pred_check
          %p552 = pneg %p276
        $region90: #{tpu_custom_call.1} parent=67 // pred_check_branch
          %554 = sbr.rel (%p552) target = $region92
        $region91: #{tpu_custom_call.1} parent=67 // pred_region
          %555 = dma.done [#allocation12], 2048
        $region92: #{tpu_custom_call.1} parent=67 // pred_fallthru
          _
        // Predicated region
        $region93: #{tpu_custom_call.1} parent=67 // pred_check
          %p556 = pneg %p297
        $region94: #{tpu_custom_call.1} parent=67 // pred_check_branch
          %558 = sbr.rel (%p556) target = $region96
        $region95: #{tpu_custom_call.1} parent=67 // pred_region
          %559 = dma.done [#allocation12], 4096
        $region96: #{tpu_custom_call.1} parent=67 // pred_fallthru
          _
        %p560 = scmp.lt.s32.totalorder %s36, 1
        %s561 = scalar_select %p560, %s36, 1
        %s562 = smul.addr %s561, 8
        %s563 = scalar_lea.vmem %s0, %s562
        %p564 = pneg %p57
        %p565 = pneg %p54
        %s566 = sand.u32 %s70, 1
        %s567 = scalar_lea.sflag [#allocation3], %s566
        %s568 = sand.u32 %s70, 1
        %s569 = smul.addr %s568, 32
        %s570 = scalar_lea.vmem [#allocation2], %s569
        %p571 = pneg %p83
        %p572 = pneg %p80
        %s573 = sand.u32 %s36, 1
        %s574 = scalar_lea.sflag [#allocation6], %s573
        %s575 = sand.u32 %s96, 1
        %s576 = smul.addr %s575, 32
        %s577 = scalar_lea.vmem [#allocation5], %s576
        %p578 = pneg %p109
        %p579 = pneg %p106
        %p580 = scmp.lt.s32.totalorder %s36, 1
        %s581 = scalar_select %p580, %s36, 1
        %s582 = smul.addr %s581, 8
        %s583 = scalar_lea.vmem %s3, %s582
        %p584 = pneg %p135
        %p585 = pneg %p132
        %s586 = sand.u32 %s36, 1
        %s587 = scalar_lea.sflag [#allocation6], %s586
        %s588 = sand.u32 %s148, 1
        %s589 = smul.addr %s588, 32
        %s590 = scalar_lea.vmem [#allocation7], %s589
        %p591 = pneg %p161
        %p592 = pneg %p158
        %s593 = sand.u32 %s36, 1
        %s594 = scalar_lea.sflag [#allocation9], %s593
        %s595 = sand.u32 %s174, 1
        %s596 = smul.addr %s595, 32
        %s597 = scalar_lea.vmem [#allocation8], %s596
        %p598 = pneg %p187
        %p599 = pneg %p184
        %p600 = scmp.lt.s32.totalorder %s36, 1
        %s601 = scalar_select %p600, %s36, 1
        %s602 = smul.addr %s601, 8
        %s603 = scalar_lea.vmem %s6, %s602
        %p604 = pneg %p213
        %p605 = pneg %p210
        %p606 = pneg %p234
        %p607 = pneg %p231
        %p608 = pneg %p255
        %p609 = pneg %p252
        %p610 = pneg %p276
        %p611 = pneg %p273
        %p612 = pneg %p297
        %p613 = pneg %p294
        %p614 = pneg %p318
        %p615 = pneg %p315
        %p616 = pneg %p344
        %p617 = pneg %p341
        %s618 = sand.u32 %s331, 1
        %s619 = scalar_lea.sflag [#allocation4], %s618
        %s620 = sand.u32 %s331, 1
        %s621 = smul.addr %s620, 8
        %s622 = scalar_lea.vmem [#allocation14], %s621
        %p623 = scmp.lt.s32.totalorder %s36, 1
        %s624 = scalar_select %p623, %s36, 1
        %s625 = smul.addr %s624, 8
        %s626 = scalar_lea.vmem %s0, %s625
        %p627 = scmp.lt.s32.totalorder %s36, 1
        %s628 = scalar_select %p627, %s36, 1
        %s629 = smul.addr %s628, 8
        %s630 = scalar_lea.vmem %s3, %s629
        %p631 = scmp.lt.s32.totalorder %s36, 1
        %s632 = scalar_select %p631, %s36, 1
        %s633 = smul.addr %s632, 8
        %s634 = scalar_lea.vmem %s6, %s633
        %v635 = vld [vmem:[%s626] sm:$0xff]
        %v636 = vld [vmem:[%s630] sm:$0xff]
        %v637 = vld [vmem:[%s634] sm:$0xff]
        %v638 = vld [vmem:[#allocation10] sm:$0xff]
        %v639 = vld [vmem:[#allocation10 + $0x8] sm:$0xff]
        %v640 = vld [vmem:[#allocation10 + $0x10] sm:$0xff]
        %v641 = vld [vmem:[#allocation10 + $0x18] sm:$0xff]
        %v642 = vld [vmem:[#allocation10 + $0x20] sm:$0xff]
        %v643 = vld [vmem:[#allocation10 + $0x28] sm:$0xff]
        %v644 = vld [vmem:[#allocation10 + $0x30] sm:$0xff]
        %v645 = vld [vmem:[#allocation10 + $0x38] sm:$0xff]
        %v646 = vld [vmem:[#allocation10 + $0x40] sm:$0xff]
        %v647 = vld [vmem:[#allocation10 + $0x48] sm:$0xff]
        %v648 = vld [vmem:[#allocation10 + $0x50] sm:$0xff]
        %v649 = vld [vmem:[#allocation10 + $0x58] sm:$0xff]
        %v650 = vld [vmem:[#allocation10 + $0x60] sm:$0xff]
        %v651 = vld [vmem:[#allocation10 + $0x68] sm:$0xff]
        %v652 = vld [vmem:[#allocation10 + $0x70] sm:$0xff]
        %v653 = vld [vmem:[#allocation10 + $0x78] sm:$0xff]
        %v654 = vld [vmem:[#allocation10 + $0x80] sm:$0xff]
        %v655 = vld [vmem:[#allocation10 + $0x88] sm:$0xff]
        %v656 = vld [vmem:[#allocation10 + $0x90] sm:$0xff]
        %v657 = vld [vmem:[#allocation10 + $0x98] sm:$0xff]
        %v658 = vld [vmem:[#allocation10 + $0xa0] sm:$0xff]
        %v659 = vld [vmem:[#allocation10 + $0xa8] sm:$0xff]
        %v660 = vld [vmem:[#allocation10 + $0xb0] sm:$0xff]
        %v661 = vld [vmem:[#allocation10 + $0xb8] sm:$0xff]
        %v662 = vld [vmem:[#allocation10 + $0xc0] sm:$0xff]
        %v663 = vld [vmem:[#allocation10 + $0xc8] sm:$0xff]
        %v664 = vld [vmem:[#allocation10 + $0xd0] sm:$0xff]
        %v665 = vld [vmem:[#allocation10 + $0xd8] sm:$0xff]
        %v666 = vld [vmem:[#allocation10 + $0xe0] sm:$0xff]
        %v667 = vld [vmem:[#allocation10 + $0xe8] sm:$0xff]
        %v668 = vld [vmem:[#allocation10 + $0xf0] sm:$0xff]
        %v669 = vld [vmem:[#allocation10 + $0xf8] sm:$0xff]
        %v670 = vld [vmem:[%s8] sm:$0x1]
        %v671 = vld [vmem:[#allocation11] sm:$0xff]
        %v672 = vld [vmem:[#allocation11 + $0x8] sm:$0xff]
        %v673 = vld [vmem:[#allocation11 + $0x10] sm:$0xff]
        %v674 = vld [vmem:[#allocation11 + $0x18] sm:$0xff]
        %v675 = vld [vmem:[#allocation11 + $0x20] sm:$0xff]
        %v676 = vld [vmem:[#allocation11 + $0x28] sm:$0xff]
        %v677 = vld [vmem:[#allocation11 + $0x30] sm:$0xff]
        %v678 = vld [vmem:[#allocation11 + $0x38] sm:$0xff]
        %v679 = vld [vmem:[#allocation11 + $0x40] sm:$0xff]
        %v680 = vld [vmem:[#allocation11 + $0x48] sm:$0xff]
        %v681 = vld [vmem:[#allocation11 + $0x50] sm:$0xff]
        %v682 = vld [vmem:[#allocation11 + $0x58] sm:$0xff]
        %v683 = vld [vmem:[#allocation11 + $0x60] sm:$0xff]
        %v684 = vld [vmem:[#allocation11 + $0x68] sm:$0xff]
        %v685 = vld [vmem:[#allocation11 + $0x70] sm:$0xff]
        %v686 = vld [vmem:[#allocation11 + $0x78] sm:$0xff]
        %v687 = vld [vmem:[#allocation13] sm:$0xff]
        %v688 = vld [vmem:[#allocation13 + $0x8] sm:$0xff]
        %v689 = vld [vmem:[#allocation13 + $0x10] sm:$0xff]
        %v690 = vld [vmem:[#allocation13 + $0x18] sm:$0xff]
        %v691 = vld [vmem:[#allocation13 + $0x20] sm:$0xff]
        %v692 = vld [vmem:[#allocation13 + $0x28] sm:$0xff]
        %v693 = vld [vmem:[#allocation13 + $0x30] sm:$0xff]
        %v694 = vld [vmem:[#allocation13 + $0x38] sm:$0xff]
        %v695 = vld [vmem:[#allocation13 + $0x40] sm:$0xff]
        %v696 = vld [vmem:[#allocation13 + $0x48] sm:$0xff]
        %v697 = vld [vmem:[#allocation13 + $0x50] sm:$0xff]
        %v698 = vld [vmem:[#allocation13 + $0x58] sm:$0xff]
        %v699 = vld [vmem:[#allocation13 + $0x60] sm:$0xff]
        %v700 = vld [vmem:[#allocation13 + $0x68] sm:$0xff]
        %v701 = vld [vmem:[#allocation13 + $0x70] sm:$0xff]
        %v702 = vld [vmem:[#allocation13 + $0x78] sm:$0xff]
        %v703 = vld [vmem:[#allocation13 + $0x80] sm:$0xff]
        %v704 = vld [vmem:[#allocation13 + $0x88] sm:$0xff]
        %v705 = vld [vmem:[#allocation13 + $0x90] sm:$0xff]
        %v706 = vld [vmem:[#allocation13 + $0x98] sm:$0xff]
        %v707 = vld [vmem:[#allocation13 + $0xa0] sm:$0xff]
        %v708 = vld [vmem:[#allocation13 + $0xa8] sm:$0xff]
        %v709 = vld [vmem:[#allocation13 + $0xb0] sm:$0xff]
        %v710 = vld [vmem:[#allocation13 + $0xb8] sm:$0xff]
        %v711 = vld [vmem:[#allocation13 + $0xc0] sm:$0xff]
        %v712 = vld [vmem:[#allocation13 + $0xc8] sm:$0xff]
        %v713 = vld [vmem:[#allocation13 + $0xd0] sm:$0xff]
        %v714 = vld [vmem:[#allocation13 + $0xd8] sm:$0xff]
        %v715 = vld [vmem:[#allocation13 + $0xe0] sm:$0xff]
        %v716 = vld [vmem:[#allocation13 + $0xe8] sm:$0xff]
        %v717 = vld [vmem:[#allocation13 + $0xf0] sm:$0xff]
        %v718 = vld [vmem:[#allocation13 + $0xf8] sm:$0xff]
        %v719 = vld [vmem:[%s11] sm:$0x1]
        %v720 = vld [vmem:[%s534] sm:$0xff]
        %v721 = vld [vmem:[%s543] sm:$0xff]
        %v723 = vlaneseq
        %v724 = vshrl.u32 %v723, 7
        %v725 = vsub.s32 0, %v724
        %v726 = vrot.slane %v670, %v725
        %728 = vmatprep.subr.mxu0 0.0
        %729 = vmatpush1.msra.mxu0 %v638
        %730 = vmatprep.subr.mxu0 0.0
        %731 = vmatpush1.msra.mxu0 %v639
        %732 = vmatprep.subr.mxu0 0.0
        %733 = vmatpush1.msra.mxu0 %v640
        %734 = vmatprep.subr.mxu0 0.0
        %735 = vmatpush1.msra.mxu0 %v641
        %736 = vmatprep.subr.mxu0 0.0
        %737 = vmatpush1.msra.mxu0 %v642
        %738 = vmatprep.subr.mxu0 0.0
        %739 = vmatpush1.msra.mxu0 %v643
        %740 = vmatprep.subr.mxu0 0.0
        %741 = vmatpush1.msra.mxu0 %v644
        %742 = vmatprep.subr.mxu0 0.0
        %743 = vmatpush1.msra.mxu0 %v645
        %744 = vmatprep.subr.mxu0 0.0
        %745 = vmatpush1.msra.mxu0 %v646
        %746 = vmatprep.subr.mxu0 0.0
        %747 = vmatpush1.msra.mxu0 %v647
        %748 = vmatprep.subr.mxu0 0.0
        %749 = vmatpush1.msra.mxu0 %v648
        %750 = vmatprep.subr.mxu0 0.0
        %751 = vmatpush1.msra.mxu0 %v649
        %752 = vmatprep.subr.mxu0 0.0
        %753 = vmatpush1.msra.mxu0 %v650
        %754 = vmatprep.subr.mxu0 0.0
        %755 = vmatpush1.msra.mxu0 %v651
        %756 = vmatprep.subr.mxu0 0.0
        %757 = vmatpush1.msra.mxu0 %v652
        %758 = vmatprep.subr.mxu0 0.0
        %759 = vmatpush1.msra.mxu0 %v653
        %760 = vmatprep.subr.mxu0 0.0
        %761 = vmatpush1.msra.mxu0 %v654
        %762 = vmatprep.subr.mxu0 0.0
        %763 = vmatpush1.msra.mxu0 %v655
        %764 = vmatprep.subr.mxu0 0.0
        %765 = vmatpush1.msra.mxu0 %v656
        %766 = vmatprep.subr.mxu0 0.0
        %767 = vmatpush1.msra.mxu0 %v657
        %768 = vmatprep.subr.mxu0 0.0
        %769 = vmatpush1.msra.mxu0 %v658
        %770 = vmatprep.subr.mxu0 0.0
        %771 = vmatpush1.msra.mxu0 %v659
        %772 = vmatprep.subr.mxu0 0.0
        %773 = vmatpush1.msra.mxu0 %v660
        %774 = vmatprep.subr.mxu0 0.0
        %775 = vmatpush1.msra.mxu0 %v661
        %776 = vmatprep.subr.mxu0 0.0
        %777 = vmatpush1.msra.mxu0 %v662
        %778 = vmatprep.subr.mxu0 0.0
        %779 = vmatpush1.msra.mxu0 %v663
        %780 = vmatprep.subr.mxu0 0.0
        %781 = vmatpush1.msra.mxu0 %v664
        %782 = vmatprep.subr.mxu0 0.0
        %783 = vmatpush1.msra.mxu0 %v665
        %784 = vmatprep.subr.mxu0 0.0
        %785 = vmatpush1.msra.mxu0 %v666
        %786 = vmatprep.subr.mxu0 0.0
        %787 = vmatpush1.msra.mxu0 %v667
        %788 = vmatprep.subr.mxu0 0.0
        %789 = vmatpush1.msra.mxu0 %v668
        %790 = vmatprep.subr.mxu0 0.0
        %791 = vmatpush1.msra.mxu0 %v669
        %792 = vmatprep.mubr.f32.mxu0 %v721
        %793 = vmatmul.mubr.f32.gmra.mrb[0].mxu0 %v720
        %v794 = vpop.f32.mrb[0].mxu0
        %v795 = vadd.f32 %v726, %v794
        %v796 = vpop.f32.mrb[0].mxu0
        %797 = vdwg.mxu0
        %798 = vmatprep.subr.mxu0 0.0
        %799 = vmatpush1.msra.mxu0 %v671
        %800 = vmatprep.subr.mxu0 0.0
        %801 = vmatpush1.msra.mxu0 %v672
        %802 = vmatprep.subr.mxu0 0.0
        %803 = vmatpush1.msra.mxu0 %v673
        %804 = vmatprep.subr.mxu0 0.0
        %805 = vmatpush1.msra.mxu0 %v674
        %806 = vmatprep.subr.mxu0 0.0
        %807 = vmatpush1.msra.mxu0 %v675
        %808 = vmatprep.subr.mxu0 0.0
        %809 = vmatpush1.msra.mxu0 %v676
        %810 = vmatprep.subr.mxu0 0.0
        %811 = vmatpush1.msra.mxu0 %v677
        %812 = vmatprep.subr.mxu0 0.0
        %813 = vmatpush1.msra.mxu0 %v678
        %814 = vmatprep.subr.mxu0 0.0
        %815 = vmatpush1.msra.mxu0 %v679
        %816 = vmatprep.subr.mxu0 0.0
        %817 = vmatpush1.msra.mxu0 %v680
        %818 = vmatprep.subr.mxu0 0.0
        %819 = vmatpush1.msra.mxu0 %v681
        %820 = vmatprep.subr.mxu0 0.0
        %821 = vmatpush1.msra.mxu0 %v682
        %822 = vmatprep.subr.mxu0 0.0
        %823 = vmatpush1.msra.mxu0 %v683
        %824 = vmatprep.subr.mxu0 0.0
        %825 = vmatpush1.msra.mxu0 %v684
        %826 = vmatprep.subr.mxu0 0.0
        %827 = vmatpush1.msra.mxu0 %v685
        %828 = vmatprep.subr.mxu0 0.0
        %829 = vmatpush1.msra.mxu0 %v686
        %830 = vmatprep.subr.mxu0 0.0
        %831 = vmatpush1.msra.mxu0 0.0
        %832 = vmatprep.subr.mxu0 0.0
        %833 = vmatpush1.msra.mxu0 0.0
        %834 = vmatprep.subr.mxu0 0.0
        %835 = vmatpush1.msra.mxu0 0.0
        %836 = vmatprep.subr.mxu0 0.0
        %837 = vmatpush1.msra.mxu0 0.0
        %838 = vmatprep.subr.mxu0 0.0
        %839 = vmatpush1.msra.mxu0 0.0
        %840 = vmatprep.subr.mxu0 0.0
        %841 = vmatpush1.msra.mxu0 0.0
        %842 = vmatprep.subr.mxu0 0.0
        %843 = vmatpush1.msra.mxu0 0.0
        %844 = vmatprep.subr.mxu0 0.0
        %845 = vmatpush1.msra.mxu0 0.0
        %846 = vmatprep.subr.mxu0 0.0
        %847 = vmatpush1.msra.mxu0 0.0
        %848 = vmatprep.subr.mxu0 0.0
        %849 = vmatpush1.msra.mxu0 0.0
        %850 = vmatprep.subr.mxu0 0.0
        %851 = vmatpush1.msra.mxu0 0.0
        %852 = vmatprep.subr.mxu0 0.0
        %853 = vmatpush1.msra.mxu0 0.0
        %854 = vmatprep.subr.mxu0 0.0
        %855 = vmatpush1.msra.mxu0 0.0
        %856 = vmatprep.subr.mxu0 0.0
        %857 = vmatpush1.msra.mxu0 0.0
        %858 = vmatprep.subr.mxu0 0.0
        %859 = vmatpush1.msra.mxu0 0.0
        %860 = vmatprep.subr.mxu0 0.0
        %861 = vmatpush1.msra.mxu0 0.0
        %862 = vmatprep.mubr.f32.mxu0 0.0
        %863 = vmatmul.mubr.f32.gmra.mrb[0].mxu0 %v795
        %v864 = vpop.f32.mrb[0].mxu0
        %v865 = vadd.f32 0.0, %v864
        %v866 = vpop.f32.mrb[0].mxu0
        %867 = vdwg.mxu0
        %v868 = vmul.f32 %v865, %v635
        %869 = vadd.xlane.f32.xlu0 %v868
        %v870 = vpop.xlane.xlu0 %869
        %v871 = vld [vmem:[%s534 + $0x8] sm:$0xff]
        %v872 = vld [vmem:[%s543 + $0x8] sm:$0xff]
        %873 = vmatprep.subr.mxu0 0.0
        %874 = vmatpush1.msra.mxu0 %v638
        %875 = vmatprep.subr.mxu0 0.0
        %876 = vmatpush1.msra.mxu0 %v639
        %877 = vmatprep.subr.mxu0 0.0
        %878 = vmatpush1.msra.mxu0 %v640
        %879 = vmatprep.subr.mxu0 0.0
        %880 = vmatpush1.msra.mxu0 %v641
        %881 = vmatprep.subr.mxu0 0.0
        %882 = vmatpush1.msra.mxu0 %v642
        %883 = vmatprep.subr.mxu0 0.0
        %884 = vmatpush1.msra.mxu0 %v643
        %885 = vmatprep.subr.mxu0 0.0
        %886 = vmatpush1.msra.mxu0 %v644
        %887 = vmatprep.subr.mxu0 0.0
        %888 = vmatpush1.msra.mxu0 %v645
        %889 = vmatprep.subr.mxu0 0.0
        %890 = vmatpush1.msra.mxu0 %v646
        %891 = vmatprep.subr.mxu0 0.0
        %892 = vmatpush1.msra.mxu0 %v647
        %893 = vmatprep.subr.mxu0 0.0
        %894 = vmatpush1.msra.mxu0 %v648
        %895 = vmatprep.subr.mxu0 0.0
        %896 = vmatpush1.msra.mxu0 %v649
        %897 = vmatprep.subr.mxu0 0.0
        %898 = vmatpush1.msra.mxu0 %v650
        %899 = vmatprep.subr.mxu0 0.0
        %900 = vmatpush1.msra.mxu0 %v651
        %901 = vmatprep.subr.mxu0 0.0
        %902 = vmatpush1.msra.mxu0 %v652
        %903 = vmatprep.subr.mxu0 0.0
        %904 = vmatpush1.msra.mxu0 %v653
        %905 = vmatprep.subr.mxu0 0.0
        %906 = vmatpush1.msra.mxu0 %v654
        %907 = vmatprep.subr.mxu0 0.0
        %908 = vmatpush1.msra.mxu0 %v655
        %909 = vmatprep.subr.mxu0 0.0
        %910 = vmatpush1.msra.mxu0 %v656
        %911 = vmatprep.subr.mxu0 0.0
        %912 = vmatpush1.msra.mxu0 %v657
        %913 = vmatprep.subr.mxu0 0.0
        %914 = vmatpush1.msra.mxu0 %v658
        %915 = vmatprep.subr.mxu0 0.0
        %916 = vmatpush1.msra.mxu0 %v659
        %917 = vmatprep.subr.mxu0 0.0
        %918 = vmatpush1.msra.mxu0 %v660
        %919 = vmatprep.subr.mxu0 0.0
        %920 = vmatpush1.msra.mxu0 %v661
        %921 = vmatprep.subr.mxu0 0.0
        %922 = vmatpush1.msra.mxu0 %v662
        %923 = vmatprep.subr.mxu0 0.0
        %924 = vmatpush1.msra.mxu0 %v663
        %925 = vmatprep.subr.mxu0 0.0
        %926 = vmatpush1.msra.mxu0 %v664
        %927 = vmatprep.subr.mxu0 0.0
        %928 = vmatpush1.msra.mxu0 %v665
        %929 = vmatprep.subr.mxu0 0.0
        %930 = vmatpush1.msra.mxu0 %v666
        %931 = vmatprep.subr.mxu0 0.0
        %932 = vmatpush1.msra.mxu0 %v667
        %933 = vmatprep.subr.mxu0 0.0
        %934 = vmatpush1.msra.mxu0 %v668
        %935 = vmatprep.subr.mxu0 0.0
        %936 = vmatpush1.msra.mxu0 %v669
        %937 = vmatprep.mubr.f32.mxu0 %v872
        %938 = vmatmul.mubr.f32.gmra.mrb[0].mxu0 %v871
        %v939 = vpop.f32.mrb[0].mxu0
        %v940 = vadd.f32 %v726, %v939
        %v941 = vpop.f32.mrb[0].mxu0
        %942 = vdwg.mxu0
        %943 = vmatprep.subr.mxu0 0.0
        %944 = vmatpush1.msra.mxu0 %v671
        %945 = vmatprep.subr.mxu0 0.0
        %946 = vmatpush1.msra.mxu0 %v672
        %947 = vmatprep.subr.mxu0 0.0
        %948 = vmatpush1.msra.mxu0 %v673
        %949 = vmatprep.subr.mxu0 0.0
        %950 = vmatpush1.msra.mxu0 %v674
        %951 = vmatprep.subr.mxu0 0.0
        %952 = vmatpush1.msra.mxu0 %v675
        %953 = vmatprep.subr.mxu0 0.0
        %954 = vmatpush1.msra.mxu0 %v676
        %955 = vmatprep.subr.mxu0 0.0
        %956 = vmatpush1.msra.mxu0 %v677
        %957 = vmatprep.subr.mxu0 0.0
        %958 = vmatpush1.msra.mxu0 %v678
        %959 = vmatprep.subr.mxu0 0.0
        %960 = vmatpush1.msra.mxu0 %v679
        %961 = vmatprep.subr.mxu0 0.0
        %962 = vmatpush1.msra.mxu0 %v680
        %963 = vmatprep.subr.mxu0 0.0
        %964 = vmatpush1.msra.mxu0 %v681
        %965 = vmatprep.subr.mxu0 0.0
        %966 = vmatpush1.msra.mxu0 %v682
        %967 = vmatprep.subr.mxu0 0.0
        %968 = vmatpush1.msra.mxu0 %v683
        %969 = vmatprep.subr.mxu0 0.0
        %970 = vmatpush1.msra.mxu0 %v684
        %971 = vmatprep.subr.mxu0 0.0
        %972 = vmatpush1.msra.mxu0 %v685
        %973 = vmatprep.subr.mxu0 0.0
        %974 = vmatpush1.msra.mxu0 %v686
        %975 = vmatprep.subr.mxu0 0.0
        %976 = vmatpush1.msra.mxu0 0.0
        %977 = vmatprep.subr.mxu0 0.0
        %978 = vmatpush1.msra.mxu0 0.0
        %979 = vmatprep.subr.mxu0 0.0
        %980 = vmatpush1.msra.mxu0 0.0
        %981 = vmatprep.subr.mxu0 0.0
        %982 = vmatpush1.msra.mxu0 0.0
        %983 = vmatprep.subr.mxu0 0.0
        %984 = vmatpush1.msra.mxu0 0.0
        %985 = vmatprep.subr.mxu0 0.0
        %986 = vmatpush1.msra.mxu0 0.0
        %987 = vmatprep.subr.mxu0 0.0
        %988 = vmatpush1.msra.mxu0 0.0
        %989 = vmatprep.subr.mxu0 0.0
        %990 = vmatpush1.msra.mxu0 0.0
        %991 = vmatprep.subr.mxu0 0.0
        %992 = vmatpush1.msra.mxu0 0.0
        %993 = vmatprep.subr.mxu0 0.0
        %994 = vmatpush1.msra.mxu0 0.0
        %995 = vmatprep.subr.mxu0 0.0
        %996 = vmatpush1.msra.mxu0 0.0
        %997 = vmatprep.subr.mxu0 0.0
        %998 = vmatpush1.msra.mxu0 0.0
        %999 = vmatprep.subr.mxu0 0.0
        %1000 = vmatpush1.msra.mxu0 0.0
        %1001 = vmatprep.subr.mxu0 0.0
        %1002 = vmatpush1.msra.mxu0 0.0
        %1003 = vmatprep.subr.mxu0 0.0
        %1004 = vmatpush1.msra.mxu0 0.0
        %1005 = vmatprep.subr.mxu0 0.0
        %1006 = vmatpush1.msra.mxu0 0.0
        %1007 = vmatprep.mubr.f32.mxu0 0.0
        %1008 = vmatmul.mubr.f32.gmra.mrb[0].mxu0 %v940
        %v1009 = vpop.f32.mrb[0].mxu0
        %v1010 = vadd.f32 0.0, %v1009
        %v1011 = vpop.f32.mrb[0].mxu0
        %1012 = vdwg.mxu0
        %v1013 = vmul.f32 %v1010, %v635
        %1014 = vadd.xlane.f32.xlu0 %v1013
        %v1015 = vpop.xlane.xlu0 %1014
        %v1016 = vld [vmem:[%s534 + $0x10] sm:$0xff]
        %v1017 = vld [vmem:[%s543 + $0x10] sm:$0xff]
        %1018 = vmatprep.subr.mxu0 0.0
        %1019 = vmatpush1.msra.mxu0 %v638
        %1020 = vmatprep.subr.mxu0 0.0
        %1021 = vmatpush1.msra.mxu0 %v639
        %1022 = vmatprep.subr.mxu0 0.0
        %1023 = vmatpush1.msra.mxu0 %v640
        %1024 = vmatprep.subr.mxu0 0.0
        %1025 = vmatpush1.msra.mxu0 %v641
        %1026 = vmatprep.subr.mxu0 0.0
        %1027 = vmatpush1.msra.mxu0 %v642
        %1028 = vmatprep.subr.mxu0 0.0
        %1029 = vmatpush1.msra.mxu0 %v643
        %1030 = vmatprep.subr.mxu0 0.0
        %1031 = vmatpush1.msra.mxu0 %v644
        %1032 = vmatprep.subr.mxu0 0.0
        %1033 = vmatpush1.msra.mxu0 %v645
        %1034 = vmatprep.subr.mxu0 0.0
        %1035 = vmatpush1.msra.mxu0 %v646
        %1036 = vmatprep.subr.mxu0 0.0
        %1037 = vmatpush1.msra.mxu0 %v647
        %1038 = vmatprep.subr.mxu0 0.0
        %1039 = vmatpush1.msra.mxu0 %v648
        %1040 = vmatprep.subr.mxu0 0.0
        %1041 = vmatpush1.msra.mxu0 %v649
        %1042 = vmatprep.subr.mxu0 0.0
        %1043 = vmatpush1.msra.mxu0 %v650
        %1044 = vmatprep.subr.mxu0 0.0
        %1045 = vmatpush1.msra.mxu0 %v651
        %1046 = vmatprep.subr.mxu0 0.0
        %1047 = vmatpush1.msra.mxu0 %v652
        %1048 = vmatprep.subr.mxu0 0.0
        %1049 = vmatpush1.msra.mxu0 %v653
        %1050 = vmatprep.subr.mxu0 0.0
        %1051 = vmatpush1.msra.mxu0 %v654
        %1052 = vmatprep.subr.mxu0 0.0
        %1053 = vmatpush1.msra.mxu0 %v655
        %1054 = vmatprep.subr.mxu0 0.0
        %1055 = vmatpush1.msra.mxu0 %v656
        %1056 = vmatprep.subr.mxu0 0.0
        %1057 = vmatpush1.msra.mxu0 %v657
        %1058 = vmatprep.subr.mxu0 0.0
        %1059 = vmatpush1.msra.mxu0 %v658
        %1060 = vmatprep.subr.mxu0 0.0
        %1061 = vmatpush1.msra.mxu0 %v659
        %1062 = vmatprep.subr.mxu0 0.0
        %1063 = vmatpush1.msra.mxu0 %v660
        %1064 = vmatprep.subr.mxu0 0.0
        %1065 = vmatpush1.msra.mxu0 %v661
        %1066 = vmatprep.subr.mxu0 0.0
        %1067 = vmatpush1.msra.mxu0 %v662
        %1068 = vmatprep.subr.mxu0 0.0
        %1069 = vmatpush1.msra.mxu0 %v663
        %1070 = vmatprep.subr.mxu0 0.0
        %1071 = vmatpush1.msra.mxu0 %v664
        %1072 = vmatprep.subr.mxu0 0.0
        %1073 = vmatpush1.msra.mxu0 %v665
        %1074 = vmatprep.subr.mxu0 0.0
        %1075 = vmatpush1.msra.mxu0 %v666
        %1076 = vmatprep.subr.mxu0 0.0
        %1077 = vmatpush1.msra.mxu0 %v667
        %1078 = vmatprep.subr.mxu0 0.0
        %1079 = vmatpush1.msra.mxu0 %v668
        %1080 = vmatprep.subr.mxu0 0.0
        %1081 = vmatpush1.msra.mxu0 %v669
        %1082 = vmatprep.mubr.f32.mxu0 %v1017
        %1083 = vmatmul.mubr.f32.gmra.mrb[0].mxu0 %v1016
        %v1084 = vpop.f32.mrb[0].mxu0
        %v1085 = vadd.f32 %v726, %v1084
        %v1086 = vpop.f32.mrb[0].mxu0
        %1087 = vdwg.mxu0
        %1088 = vmatprep.subr.mxu0 0.0
        %1089 = vmatpush1.msra.mxu0 %v671
        %1090 = vmatprep.subr.mxu0 0.0
        %1091 = vmatpush1.msra.mxu0 %v672
        %1092 = vmatprep.subr.mxu0 0.0
        %1093 = vmatpush1.msra.mxu0 %v673
        %1094 = vmatprep.subr.mxu0 0.0
        %1095 = vmatpush1.msra.mxu0 %v674
        %1096 = vmatprep.subr.mxu0 0.0
        %1097 = vmatpush1.msra.mxu0 %v675
        %1098 = vmatprep.subr.mxu0 0.0
        %1099 = vmatpush1.msra.mxu0 %v676
        %1100 = vmatprep.subr.mxu0 0.0
        %1101 = vmatpush1.msra.mxu0 %v677
        %1102 = vmatprep.subr.mxu0 0.0
        %1103 = vmatpush1.msra.mxu0 %v678
        %1104 = vmatprep.subr.mxu0 0.0
        %1105 = vmatpush1.msra.mxu0 %v679
        %1106 = vmatprep.subr.mxu0 0.0
        %1107 = vmatpush1.msra.mxu0 %v680
        %1108 = vmatprep.subr.mxu0 0.0
        %1109 = vmatpush1.msra.mxu0 %v681
        %1110 = vmatprep.subr.mxu0 0.0
        %1111 = vmatpush1.msra.mxu0 %v682
        %1112 = vmatprep.subr.mxu0 0.0
        %1113 = vmatpush1.msra.mxu0 %v683
        %1114 = vmatprep.subr.mxu0 0.0
        %1115 = vmatpush1.msra.mxu0 %v684
        %1116 = vmatprep.subr.mxu0 0.0
        %1117 = vmatpush1.msra.mxu0 %v685
        %1118 = vmatprep.subr.mxu0 0.0
        %1119 = vmatpush1.msra.mxu0 %v686
        %1120 = vmatprep.subr.mxu0 0.0
        %1121 = vmatpush1.msra.mxu0 0.0
        %1122 = vmatprep.subr.mxu0 0.0
        %1123 = vmatpush1.msra.mxu0 0.0
        %1124 = vmatprep.subr.mxu0 0.0
        %1125 = vmatpush1.msra.mxu0 0.0
        %1126 = vmatprep.subr.mxu0 0.0
        %1127 = vmatpush1.msra.mxu0 0.0
        %1128 = vmatprep.subr.mxu0 0.0
        %1129 = vmatpush1.msra.mxu0 0.0
        %1130 = vmatprep.subr.mxu0 0.0
        %1131 = vmatpush1.msra.mxu0 0.0
        %1132 = vmatprep.subr.mxu0 0.0
        %1133 = vmatpush1.msra.mxu0 0.0
        %1134 = vmatprep.subr.mxu0 0.0
        %1135 = vmatpush1.msra.mxu0 0.0
        %1136 = vmatprep.subr.mxu0 0.0
        %1137 = vmatpush1.msra.mxu0 0.0
        %1138 = vmatprep.subr.mxu0 0.0
        %1139 = vmatpush1.msra.mxu0 0.0
        %1140 = vmatprep.subr.mxu0 0.0
        %1141 = vmatpush1.msra.mxu0 0.0
        %1142 = vmatprep.subr.mxu0 0.0
        %1143 = vmatpush1.msra.mxu0 0.0
        %1144 = vmatprep.subr.mxu0 0.0
        %1145 = vmatpush1.msra.mxu0 0.0
        %1146 = vmatprep.subr.mxu0 0.0
        %1147 = vmatpush1.msra.mxu0 0.0
        %1148 = vmatprep.subr.mxu0 0.0
        %1149 = vmatpush1.msra.mxu0 0.0
        %1150 = vmatprep.subr.mxu0 0.0
        %1151 = vmatpush1.msra.mxu0 0.0
        %1152 = vmatprep.mubr.f32.mxu0 0.0
        %1153 = vmatmul.mubr.f32.gmra.mrb[0].mxu0 %v1085
        %v1154 = vpop.f32.mrb[0].mxu0
        %v1155 = vadd.f32 0.0, %v1154
        %v1156 = vpop.f32.mrb[0].mxu0
        %1157 = vdwg.mxu0
        %v1158 = vmul.f32 %v1155, %v635
        %1159 = vadd.xlane.f32.xlu0 %v1158
        %v1160 = vpop.xlane.xlu0 %1159
        %v1161 = vld [vmem:[%s534 + $0x18] sm:$0xff]
        %v1162 = vld [vmem:[%s543 + $0x18] sm:$0xff]
        %1163 = vmatprep.subr.mxu0 0.0
        %1164 = vmatpush1.msra.mxu0 %v638
        %1165 = vmatprep.subr.mxu0 0.0
        %1166 = vmatpush1.msra.mxu0 %v639
        %1167 = vmatprep.subr.mxu0 0.0
        %1168 = vmatpush1.msra.mxu0 %v640
        %1169 = vmatprep.subr.mxu0 0.0
        %1170 = vmatpush1.msra.mxu0 %v641
        %1171 = vmatprep.subr.mxu0 0.0
        %1172 = vmatpush1.msra.mxu0 %v642
        %1173 = vmatprep.subr.mxu0 0.0
        %1174 = vmatpush1.msra.mxu0 %v643
        %1175 = vmatprep.subr.mxu0 0.0
        %1176 = vmatpush1.msra.mxu0 %v644
        %1177 = vmatprep.subr.mxu0 0.0
        %1178 = vmatpush1.msra.mxu0 %v645
        %1179 = vmatprep.subr.mxu0 0.0
        %1180 = vmatpush1.msra.mxu0 %v646
        %1181 = vmatprep.subr.mxu0 0.0
        %1182 = vmatpush1.msra.mxu0 %v647
        %1183 = vmatprep.subr.mxu0 0.0
        %1184 = vmatpush1.msra.mxu0 %v648
        %1185 = vmatprep.subr.mxu0 0.0
        %1186 = vmatpush1.msra.mxu0 %v649
        %1187 = vmatprep.subr.mxu0 0.0
        %1188 = vmatpush1.msra.mxu0 %v650
        %1189 = vmatprep.subr.mxu0 0.0
        %1190 = vmatpush1.msra.mxu0 %v651
        %1191 = vmatprep.subr.mxu0 0.0
        %1192 = vmatpush1.msra.mxu0 %v652
        %1193 = vmatprep.subr.mxu0 0.0
        %1194 = vmatpush1.msra.mxu0 %v653
        %1195 = vmatprep.subr.mxu0 0.0
        %1196 = vmatpush1.msra.mxu0 %v654
        %1197 = vmatprep.subr.mxu0 0.0
        %1198 = vmatpush1.msra.mxu0 %v655
        %1199 = vmatprep.subr.mxu0 0.0
        %1200 = vmatpush1.msra.mxu0 %v656
        %1201 = vmatprep.subr.mxu0 0.0
        %1202 = vmatpush1.msra.mxu0 %v657
        %1203 = vmatprep.subr.mxu0 0.0
        %1204 = vmatpush1.msra.mxu0 %v658
        %1205 = vmatprep.subr.mxu0 0.0
        %1206 = vmatpush1.msra.mxu0 %v659
        %1207 = vmatprep.subr.mxu0 0.0
        %1208 = vmatpush1.msra.mxu0 %v660
        %1209 = vmatprep.subr.mxu0 0.0
        %1210 = vmatpush1.msra.mxu0 %v661
        %1211 = vmatprep.subr.mxu0 0.0
        %1212 = vmatpush1.msra.mxu0 %v662
        %1213 = vmatprep.subr.mxu0 0.0
        %1214 = vmatpush1.msra.mxu0 %v663
        %1215 = vmatprep.subr.mxu0 0.0
        %1216 = vmatpush1.msra.mxu0 %v664
        %1217 = vmatprep.subr.mxu0 0.0
        %1218 = vmatpush1.msra.mxu0 %v665
        %1219 = vmatprep.subr.mxu0 0.0
        %1220 = vmatpush1.msra.mxu0 %v666
        %1221 = vmatprep.subr.mxu0 0.0
        %1222 = vmatpush1.msra.mxu0 %v667
        %1223 = vmatprep.subr.mxu0 0.0
        %1224 = vmatpush1.msra.mxu0 %v668
        %1225 = vmatprep.subr.mxu0 0.0
        %1226 = vmatpush1.msra.mxu0 %v669
        %1227 = vmatprep.mubr.f32.mxu0 %v1162
        %1228 = vmatmul.mubr.f32.gmra.mrb[0].mxu0 %v1161
        %v1229 = vpop.f32.mrb[0].mxu0
        %v1230 = vadd.f32 %v726, %v1229
        %v1231 = vpop.f32.mrb[0].mxu0
        %1232 = vdwg.mxu0
        %1233 = vmatprep.subr.mxu0 0.0
        %1234 = vmatpush1.msra.mxu0 %v671
        %1235 = vmatprep.subr.mxu0 0.0
        %1236 = vmatpush1.msra.mxu0 %v672
        %1237 = vmatprep.subr.mxu0 0.0
        %1238 = vmatpush1.msra.mxu0 %v673
        %1239 = vmatprep.subr.mxu0 0.0
        %1240 = vmatpush1.msra.mxu0 %v674
        %1241 = vmatprep.subr.mxu0 0.0
        %1242 = vmatpush1.msra.mxu0 %v675
        %1243 = vmatprep.subr.mxu0 0.0
        %1244 = vmatpush1.msra.mxu0 %v676
        %1245 = vmatprep.subr.mxu0 0.0
        %1246 = vmatpush1.msra.mxu0 %v677
        %1247 = vmatprep.subr.mxu0 0.0
        %1248 = vmatpush1.msra.mxu0 %v678
        %1249 = vmatprep.subr.mxu0 0.0
        %1250 = vmatpush1.msra.mxu0 %v679
        %1251 = vmatprep.subr.mxu0 0.0
        %1252 = vmatpush1.msra.mxu0 %v680
        %1253 = vmatprep.subr.mxu0 0.0
        %1254 = vmatpush1.msra.mxu0 %v681
        %1255 = vmatprep.subr.mxu0 0.0
        %1256 = vmatpush1.msra.mxu0 %v682
        %1257 = vmatprep.subr.mxu0 0.0
        %1258 = vmatpush1.msra.mxu0 %v683
        %1259 = vmatprep.subr.mxu0 0.0
        %1260 = vmatpush1.msra.mxu0 %v684
        %1261 = vmatprep.subr.mxu0 0.0
        %1262 = vmatpush1.msra.mxu0 %v685
        %1263 = vmatprep.subr.mxu0 0.0
        %1264 = vmatpush1.msra.mxu0 %v686
        %1265 = vmatprep.subr.mxu0 0.0
        %1266 = vmatpush1.msra.mxu0 0.0
        %1267 = vmatprep.subr.mxu0 0.0
        %1268 = vmatpush1.msra.mxu0 0.0
        %1269 = vmatprep.subr.mxu0 0.0
        %1270 = vmatpush1.msra.mxu0 0.0
        %1271 = vmatprep.subr.mxu0 0.0
        %1272 = vmatpush1.msra.mxu0 0.0
        %1273 = vmatprep.subr.mxu0 0.0
        %1274 = vmatpush1.msra.mxu0 0.0
        %1275 = vmatprep.subr.mxu0 0.0
        %1276 = vmatpush1.msra.mxu0 0.0
        %1277 = vmatprep.subr.mxu0 0.0
        %1278 = vmatpush1.msra.mxu0 0.0
        %1279 = vmatprep.subr.mxu0 0.0
        %1280 = vmatpush1.msra.mxu0 0.0
        %1281 = vmatprep.subr.mxu0 0.0
        %1282 = vmatpush1.msra.mxu0 0.0
        %1283 = vmatprep.subr.mxu0 0.0
        %1284 = vmatpush1.msra.mxu0 0.0
        %1285 = vmatprep.subr.mxu0 0.0
        %1286 = vmatpush1.msra.mxu0 0.0
        %1287 = vmatprep.subr.mxu0 0.0
        %1288 = vmatpush1.msra.mxu0 0.0
        %1289 = vmatprep.subr.mxu0 0.0
        %1290 = vmatpush1.msra.mxu0 0.0
        %1291 = vmatprep.subr.mxu0 0.0
        %1292 = vmatpush1.msra.mxu0 0.0
        %1293 = vmatprep.subr.mxu0 0.0
        %1294 = vmatpush1.msra.mxu0 0.0
        %1295 = vmatprep.subr.mxu0 0.0
        %1296 = vmatpush1.msra.mxu0 0.0
        %1297 = vmatprep.mubr.f32.mxu0 0.0
        %1298 = vmatmul.mubr.f32.gmra.mrb[0].mxu0 %v1230
        %v1299 = vpop.f32.mrb[0].mxu0
        %v1300 = vadd.f32 0.0, %v1299
        %v1301 = vpop.f32.mrb[0].mxu0
        %1302 = vdwg.mxu0
        %v1303 = vmul.f32 %v1300, %v635
        %1304 = vadd.xlane.f32.xlu0 %v1303
        %v1305 = vpop.xlane.xlu0 %1304
        %vm1306 = vcmask 7168
        %v1307 = vsel %vm1306, %v870, %v1015
        %vm1308 = vcmask 15360
        %v1309 = vsel %vm1308, %v1307, %v1160
        %vm1310 = vcmask 23552
        %v1311 = vsel %vm1310, %v1309, %v1305
        %vm1312 = vcmask 31744
        %v1313 = vsel %vm1312, %v1311, -inf
        %1314 = vmax.xlane.f32.xlu0 %v1313
        %v1315 = vpop.xlane.xlu0 %1314
        %v1316 = vsub.f32 %v1311, %v1315
        %v1317 = vmul.f32 %v1316, 1.442695
        %v1318 = vpow.pop %v1317
        %v1319 = vsel %vm1312, %v1318, 0.0
        %1320 = vadd.xlane.f32.xlu0 %v1319
        %v1321 = vpop.xlane.xlu0 %1320
        %v1322 = vrcp.pop %v1321
        %v1323 = vmul.f32 %v1318, %v1322
        %v1324 = vmul.f32 %v1323, %v637
        %1326 = vset.pattern.permute.xlu0 0
        %1327 = vperm.xlu0 %1326, %v1324
        %v1328 = vpop.permute.xlu0 %1327
        %v1330 = vmul.f32 %v1328, %v720
        %v1331 = vmul.f32 %v1328, %v721
        %1332 = vset.pattern.permute.xlu0 1
        %1333 = vperm.xlu0 %1332, %v1324
        %v1334 = vpop.permute.xlu0 %1333
        %v1336 = vmul.f32 %v1334, %v871
        %v1337 = vmul.f32 %v1334, %v872
        %v1338 = vadd.f32 %v1330, %v1336
        %v1339 = vadd.f32 %v1331, %v1337
        %1340 = vset.pattern.permute.xlu0 2
        %1341 = vperm.xlu0 %1340, %v1324
        %v1342 = vpop.permute.xlu0 %1341
        %v1344 = vmul.f32 %v1342, %v1016
        %v1345 = vmul.f32 %v1342, %v1017
        %v1346 = vadd.f32 %v1338, %v1344
        %v1347 = vadd.f32 %v1339, %v1345
        %1348 = vset.pattern.permute.xlu0 3
        %1349 = vperm.xlu0 %1348, %v1324
        %v1350 = vpop.permute.xlu0 %1349
        %v1352 = vmul.f32 %v1350, %v1161
        %v1353 = vmul.f32 %v1350, %v1162
        %v1354 = vadd.f32 %v1346, %v1352
        %v1355 = vadd.f32 %v1347, %v1353
        %v1356 = vld [vmem:[%s516] sm:$0xff]
        %v1357 = vld [vmem:[%s525] sm:$0xff]
        %1359 = vset.pattern.permute.xlu0 0
        %1360 = vperm.xlu0 %1359, %v636
        %v1361 = vpop.permute.xlu0 %1360
        %v1363 = vmul.f32 %v1361, %v1356
        %v1364 = vmul.f32 %v1361, %v1357
        %v1365 = vld [vmem:[%s516 + $0x8] sm:$0xff]
        %v1366 = vld [vmem:[%s525 + $0x8] sm:$0xff]
        %1367 = vset.pattern.permute.xlu0 1
        %1368 = vperm.xlu0 %1367, %v636
        %v1369 = vpop.permute.xlu0 %1368
        %v1371 = vmul.f32 %v1369, %v1365
        %v1372 = vmul.f32 %v1369, %v1366
        %v1373 = vadd.f32 %v1363, %v1371
        %v1374 = vadd.f32 %v1364, %v1372
        %v1375 = vld [vmem:[%s516 + $0x10] sm:$0xff]
        %v1376 = vld [vmem:[%s525 + $0x10] sm:$0xff]
        %1377 = vset.pattern.permute.xlu0 2
        %1378 = vperm.xlu0 %1377, %v636
        %v1379 = vpop.permute.xlu0 %1378
        %v1381 = vmul.f32 %v1379, %v1375
        %v1382 = vmul.f32 %v1379, %v1376
        %v1383 = vadd.f32 %v1373, %v1381
        %v1384 = vadd.f32 %v1374, %v1382
        %v1385 = vld [vmem:[%s516 + $0x18] sm:$0xff]
        %v1386 = vld [vmem:[%s525 + $0x18] sm:$0xff]
        %1387 = vset.pattern.permute.xlu0 3
        %1388 = vperm.xlu0 %1387, %v636
        %v1389 = vpop.permute.xlu0 %1388
        %v1391 = vmul.f32 %v1389, %v1385
        %v1392 = vmul.f32 %v1389, %v1386
        %v1393 = vadd.f32 %v1383, %v1391
        %v1394 = vadd.f32 %v1384, %v1392
        %v1396 = vlaneseq
        %v1397 = vshrl.u32 %v1396, 7
        %v1398 = vsub.s32 0, %v1397
        %v1399 = vrot.slane %v719, %v1398
        %1401 = vmatprep.subr.mxu0 0.0
        %1402 = vmatpush1.msra.mxu0 %v687
        %1403 = vmatprep.subr.mxu0 0.0
        %1404 = vmatpush1.msra.mxu0 %v688
        %1405 = vmatprep.subr.mxu0 0.0
        %1406 = vmatpush1.msra.mxu0 %v689
        %1407 = vmatprep.subr.mxu0 0.0
        %1408 = vmatpush1.msra.mxu0 %v690
        %1409 = vmatprep.subr.mxu0 0.0
        %1410 = vmatpush1.msra.mxu0 %v691
        %1411 = vmatprep.subr.mxu0 0.0
        %1412 = vmatpush1.msra.mxu0 %v692
        %1413 = vmatprep.subr.mxu0 0.0
        %1414 = vmatpush1.msra.mxu0 %v693
        %1415 = vmatprep.subr.mxu0 0.0
        %1416 = vmatpush1.msra.mxu0 %v694
        %1417 = vmatprep.subr.mxu0 0.0
        %1418 = vmatpush1.msra.mxu0 %v695
        %1419 = vmatprep.subr.mxu0 0.0
        %1420 = vmatpush1.msra.mxu0 %v696
        %1421 = vmatprep.subr.mxu0 0.0
        %1422 = vmatpush1.msra.mxu0 %v697
        %1423 = vmatprep.subr.mxu0 0.0
        %1424 = vmatpush1.msra.mxu0 %v698
        %1425 = vmatprep.subr.mxu0 0.0
        %1426 = vmatpush1.msra.mxu0 %v699
        %1427 = vmatprep.subr.mxu0 0.0
        %1428 = vmatpush1.msra.mxu0 %v700
        %1429 = vmatprep.subr.mxu0 0.0
        %1430 = vmatpush1.msra.mxu0 %v701
        %1431 = vmatprep.subr.mxu0 0.0
        %1432 = vmatpush1.msra.mxu0 %v702
        %1433 = vmatprep.subr.mxu0 0.0
        %1434 = vmatpush1.msra.mxu0 %v703
        %1435 = vmatprep.subr.mxu0 0.0
        %1436 = vmatpush1.msra.mxu0 %v704
        %1437 = vmatprep.subr.mxu0 0.0
        %1438 = vmatpush1.msra.mxu0 %v705
        %1439 = vmatprep.subr.mxu0 0.0
        %1440 = vmatpush1.msra.mxu0 %v706
        %1441 = vmatprep.subr.mxu0 0.0
        %1442 = vmatpush1.msra.mxu0 %v707
        %1443 = vmatprep.subr.mxu0 0.0
        %1444 = vmatpush1.msra.mxu0 %v708
        %1445 = vmatprep.subr.mxu0 0.0
        %1446 = vmatpush1.msra.mxu0 %v709
        %1447 = vmatprep.subr.mxu0 0.0
        %1448 = vmatpush1.msra.mxu0 %v710
        %1449 = vmatprep.subr.mxu0 0.0
        %1450 = vmatpush1.msra.mxu0 %v711
        %1451 = vmatprep.subr.mxu0 0.0
        %1452 = vmatpush1.msra.mxu0 %v712
        %1453 = vmatprep.subr.mxu0 0.0
        %1454 = vmatpush1.msra.mxu0 %v713
        %1455 = vmatprep.subr.mxu0 0.0
        %1456 = vmatpush1.msra.mxu0 %v714
        %1457 = vmatprep.subr.mxu0 0.0
        %1458 = vmatpush1.msra.mxu0 %v715
        %1459 = vmatprep.subr.mxu0 0.0
        %1460 = vmatpush1.msra.mxu0 %v716
        %1461 = vmatprep.subr.mxu0 0.0
        %1462 = vmatpush1.msra.mxu0 %v717
        %1463 = vmatprep.subr.mxu0 0.0
        %1464 = vmatpush1.msra.mxu0 %v718
        %1465 = vmatprep.mubr.f32.mxu0 %v1355
        %1466 = vmatmul.mubr.f32.gmra.mrb[0].mxu0 %v1354
        %v1467 = vpop.f32.mrb[0].mxu0
        %v1468 = vadd.f32 %v1399, %v1467
        %v1469 = vpop.f32.mrb[0].mxu0
        %1470 = vdwg.mxu0
        %1471 = vmatprep.subr.mxu0 0.0
        %1472 = vmatpush1.msra.mxu0 %v687
        %1473 = vmatprep.subr.mxu0 0.0
        %1474 = vmatpush1.msra.mxu0 %v688
        %1475 = vmatprep.subr.mxu0 0.0
        %1476 = vmatpush1.msra.mxu0 %v689
        %1477 = vmatprep.subr.mxu0 0.0
        %1478 = vmatpush1.msra.mxu0 %v690
        %1479 = vmatprep.subr.mxu0 0.0
        %1480 = vmatpush1.msra.mxu0 %v691
        %1481 = vmatprep.subr.mxu0 0.0
        %1482 = vmatpush1.msra.mxu0 %v692
        %1483 = vmatprep.subr.mxu0 0.0
        %1484 = vmatpush1.msra.mxu0 %v693
        %1485 = vmatprep.subr.mxu0 0.0
        %1486 = vmatpush1.msra.mxu0 %v694
        %1487 = vmatprep.subr.mxu0 0.0
        %1488 = vmatpush1.msra.mxu0 %v695
        %1489 = vmatprep.subr.mxu0 0.0
        %1490 = vmatpush1.msra.mxu0 %v696
        %1491 = vmatprep.subr.mxu0 0.0
        %1492 = vmatpush1.msra.mxu0 %v697
        %1493 = vmatprep.subr.mxu0 0.0
        %1494 = vmatpush1.msra.mxu0 %v698
        %1495 = vmatprep.subr.mxu0 0.0
        %1496 = vmatpush1.msra.mxu0 %v699
        %1497 = vmatprep.subr.mxu0 0.0
        %1498 = vmatpush1.msra.mxu0 %v700
        %1499 = vmatprep.subr.mxu0 0.0
        %1500 = vmatpush1.msra.mxu0 %v701
        %1501 = vmatprep.subr.mxu0 0.0
        %1502 = vmatpush1.msra.mxu0 %v702
        %1503 = vmatprep.subr.mxu0 0.0
        %1504 = vmatpush1.msra.mxu0 %v703
        %1505 = vmatprep.subr.mxu0 0.0
        %1506 = vmatpush1.msra.mxu0 %v704
        %1507 = vmatprep.subr.mxu0 0.0
        %1508 = vmatpush1.msra.mxu0 %v705
        %1509 = vmatprep.subr.mxu0 0.0
        %1510 = vmatpush1.msra.mxu0 %v706
        %1511 = vmatprep.subr.mxu0 0.0
        %1512 = vmatpush1.msra.mxu0 %v707
        %1513 = vmatprep.subr.mxu0 0.0
        %1514 = vmatpush1.msra.mxu0 %v708
        %1515 = vmatprep.subr.mxu0 0.0
        %1516 = vmatpush1.msra.mxu0 %v709
        %1517 = vmatprep.subr.mxu0 0.0
        %1518 = vmatpush1.msra.mxu0 %v710
        %1519 = vmatprep.subr.mxu0 0.0
        %1520 = vmatpush1.msra.mxu0 %v711
        %1521 = vmatprep.subr.mxu0 0.0
        %1522 = vmatpush1.msra.mxu0 %v712
        %1523 = vmatprep.subr.mxu0 0.0
        %1524 = vmatpush1.msra.mxu0 %v713
        %1525 = vmatprep.subr.mxu0 0.0
        %1526 = vmatpush1.msra.mxu0 %v714
        %1527 = vmatprep.subr.mxu0 0.0
        %1528 = vmatpush1.msra.mxu0 %v715
        %1529 = vmatprep.subr.mxu0 0.0
        %1530 = vmatpush1.msra.mxu0 %v716
        %1531 = vmatprep.subr.mxu0 0.0
        %1532 = vmatpush1.msra.mxu0 %v717
        %1533 = vmatprep.subr.mxu0 0.0
        %1534 = vmatpush1.msra.mxu0 %v718
        %1535 = vmatprep.mubr.f32.mxu0 %v1394
        %1536 = vmatmul.mubr.f32.gmra.mrb[0].mxu0 %v1393
        %v1537 = vpop.f32.mrb[0].mxu0
        %v1538 = vadd.f32 %v1399, %v1537
        %v1539 = vpop.f32.mrb[0].mxu0
        %1540 = vdwg.mxu0
        %v1541 = vadd.f32 %v635, %v1468
        %v1542 = vadd.f32 %v1541, %v1538
        %1543 = vst [vmem:[%s622] sm:$0xff] %v1542
        %s1544 = sand.u32 %s331, 1
        %s1545 = scalar_lea.sflag [#allocation4], %s1544
        %s1546 = sand.u32 %s331, 1
        %s1547 = smul.addr %s1546, 8
        %s1548 = scalar_lea.vmem [#allocation14], %s1547
        // Predicated region
        $region97: #{tpu_custom_call.1} parent=67 // pred_check
          %p1549 = pneg %p341
        $region98: #{tpu_custom_call.1} parent=67 // pred_check_branch
          %1551 = sbr.rel (%p1549) target = $region100
        $region99: #{tpu_custom_call.1} parent=67 // pred_region
          %s1553 = ssub.s32 128, 128
          %1554 = vsyncadd %s1545, %s1553
          %s1555 = smul.addr %s36, 128
          %s1556 = scalar_lea.hbm %s12, %s1555
          %s1558 = sshll.u32 %s1548, 4
          %s1559 = int_to_ptr.vmem [resolvable:$true] %s1558
          %1561 = dma.vmem_to_hbm [thread:$0]  %s1559, 128, %s1556, %s1545
        $region100: #{tpu_custom_call.1} parent=67 // pred_fallthru
          _
      $region68: #{tpu_custom_call.1} parent=5 // pred_fallthru
        _
      %p1562 = scmp.le.s32.totalorder 2, %s31
      // Predicated region
      $region101: #{tpu_custom_call.1} parent=5 // pred_check
        %p1563 = pneg %p1562
      $region102: #{tpu_custom_call.1} parent=5 // pred_check_branch
        %1565 = sbr.rel (%p1563) target = $region104
      $region103: #{tpu_custom_call.1} parent=5 // pred_region
        %s1566 = ssub.s32 %s31, 2
        // Predicated region
        $region105: #{tpu_custom_call.1} parent=103 // pred_check
          %p1567 = pneg %p347
        $region106: #{tpu_custom_call.1} parent=103 // pred_check_branch
          %1569 = sbr.rel (%p1567) target = $region108
        $region107: #{tpu_custom_call.1} parent=103 // pred_region
          %s1570 = sand.u32 %s332, 1
          %s1571 = scalar_lea.sflag [#allocation4], %s1570
          %s1572 = sand.u32 %s332, 1
          %s1573 = smul.addr %s1572, 8
          %s1574 = scalar_lea.vmem [#allocation14], %s1573
          %1575 = dma.done %s1571, 128
        $region108: #{tpu_custom_call.1} parent=103 // pred_fallthru
          _
      $region104: #{tpu_custom_call.1} parent=5 // pred_fallthru
        _
    $region6: #{tpu_custom_call.1} parent=1 // loop_footer
      %s35 = sadd.s32 1, %s31
    $region7: #{tpu_custom_call.1} parent=1 // loop_footer_branch
      %30 = sbr.rel target = $region3
    $region8: #{tpu_custom_call.1} parent=1 // loop_exit
      _
    %1576 = vsyncpa [#allocation3], 1
    %s1577 = scalar_lea.sflag [#allocation3], 1
    %1578 = vsyncpa %s1577, 1
    %1579 = vsyncpa [#allocation6], 1
    %s1580 = scalar_lea.sflag [#allocation6], 1
    %1581 = vsyncpa %s1580, 1
    %1582 = vsyncpa [#allocation9], 1
    %s1583 = scalar_lea.sflag [#allocation9], 1
    %1584 = vsyncpa %s1583, 1
    %1585 = vsyncpa [#allocation12], 1
    %1586 = vsyncpa [#allocation4], 1
    %s1587 = scalar_lea.sflag [#allocation4], 1
    %1588 = vsyncpa %s1587, 1

</llo_original>
